<compile_context>
chip_gen: v7x
topology: tpu7x:2x2x1
jax: 0.10.0
libtpu: 0.0.40
codegen_flags: <defaults>
</compile_context>

<pallas_src>
import functools

import numpy as np
import jax
import jax.numpy as jnp
from jax.experimental import pallas as pl
from jax.experimental.pallas import tpu as pltpu


# ---------------------------------------------------------------------------
# Host-side constant matrices (exactly the PyTorch ops' semantics, float64).
# ---------------------------------------------------------------------------
def _adaptive_avg_pool_matrix(in_size: int, out_size: int) -> np.ndarray:
    """A (out,in) with A @ v == AdaptiveAvgPool1d(v, out_size) (PyTorch windows)."""
    A = np.zeros((out_size, in_size), dtype=np.float64)
    for i in range(out_size):
        start = (i * in_size) // out_size
        end = ((i + 1) * in_size + out_size - 1) // out_size  # ceil
        A[i, start:end] = 1.0 / (end - start)
    return A


def _bilinear_upsample_matrix(in_size: int, out_size: int) -> np.ndarray:
    """B (out,in) matching F.interpolate(mode='bilinear', align_corners=False) per axis."""
    B = np.zeros((out_size, in_size), dtype=np.float64)
    scale = in_size / out_size
    for o in range(out_size):
        src = max((o + 0.5) * scale - 0.5, 0.0)
        i0 = min(int(np.floor(src)), in_size - 1)
        i1 = min(i0 + 1, in_size - 1)
        frac = src - i0
        B[o, i0] += 1.0 - frac
        B[o, i1] += frac
    return B


# ---------------------------------------------------------------------------
# Parameters (mirrors PPM.__init__: channels = in_channels // 4, sizes=(1,2,3,6)).
# Bottleneck weight column order follows the PyTorch concat: priors first, feats last.
# ---------------------------------------------------------------------------
def init_ppm_params(key, in_channels, channels=None, sizes=(1, 2, 3, 6)):
    if not channels:
        channels = in_channels // 4
    K = len(sizes)
    keys = jax.random.split(key, 2 * K + 2)
    stage_w, stage_b = [], []
    for k in range(K):
        stage_w.append(jax.random.normal(keys[2 * k], (channels, in_channels),
                                         jnp.float32) / np.sqrt(in_channels))
        stage_b.append(jax.random.normal(keys[2 * k + 1], (channels,), jnp.float32) * 0.1)
    fan_in = in_channels + K * channels
    w_b = jax.random.normal(keys[-2], (in_channels, fan_in), jnp.float32) / np.sqrt(fan_in)
    b_b = jax.random.normal(keys[-1], (in_channels,), jnp.float32) * 0.1
    return dict(sizes=tuple(sizes), channels=channels, stage_w=stage_w, stage_b=stage_b,
                bottleneck_w=w_b, bottleneck_b=b_b)


def fold_ppm_params(params, H, W, compute_dtype=jnp.bfloat16):
    """Pack pool/upsample matrices + conv weights into kernel-friendly, lane-dense stacks."""
    sizes = params["sizes"]
    K = len(sizes)
    ch = params["channels"]
    HW = H * W
    S = sum(s * s for s in sizes)
    kch = K * ch
    w_b = np.asarray(params["bottleneck_w"], np.float64)   # (C, K*ch + C): priors cols first, feats cols last
    C = w_b.shape[0]

    # W1: feats-branch bottleneck columns stacked on top of every stage's 1x1 conv weight.
    w1 = np.concatenate([w_b[:, kch:]]
                        + [np.asarray(w, np.float64) for w in params["stage_w"]], axis=0)  # (C+K*ch, C)
    w2 = w_b[:, :kch]                                                                      # (C, K*ch)
    bs = np.concatenate([np.asarray(b, np.float64) for b in params["stage_b"]])[:, None]   # (K*ch, 1)
    bb = np.asarray(params["bottleneck_b"], np.float64)[:, None]                           # (C, 1)

    pt = np.zeros((S, HW), np.float64)      # all stages' pooling matrices, lane-dense (HW last)
    ut = np.zeros((S, HW), np.float64)      # all stages' upsample matrices (transposed), lane-dense
    mask = np.zeros((kch, S), np.float32)   # block-diagonal stage selector
    off = 0
    for k, s in enumerate(sizes):
        P = np.kron(_adaptive_avg_pool_matrix(H, s), _adaptive_avg_pool_matrix(W, s))  # (s*s, HW)
        U = np.kron(_bilinear_upsample_matrix(s, H), _bilinear_upsample_matrix(s, W))  # (HW, s*s)
        pt[off:off + s * s, :] = P
        ut[off:off + s * s, :] = U.T
        mask[k * ch:(k + 1) * ch, off:off + s * s] = 1.0
        off += s * s

    cdt = compute_dtype
    return dict(sizes=sizes, channels=ch, S=S,
                w1=jnp.asarray(w1, cdt), w2=jnp.asarray(w2, cdt),
                pt=jnp.asarray(pt, cdt), ut=jnp.asarray(ut, cdt),
                bs=jnp.asarray(bs, jnp.float32), bb=jnp.asarray(bb, jnp.float32),
                mask=jnp.asarray(mask, jnp.float32))


# ---------------------------------------------------------------------------
# Fused PPM kernel: one grid step per batch-block, everything lane-dense in VMEM.
# ---------------------------------------------------------------------------
def _ppm_kernel(x_ref, w1_ref, w2_ref, bs_ref, bb_ref, pt_ref, ut_ref, mask_ref,
                o_ref, *, nb, hw, c_in, cdt):
    x = x_ref[...]                                                        # (C, nb*hw)
    # One MXU call: rows [:C] = bottleneck@feats branch, rows [C:] = all stage 1x1 convs.
    y = jnp.dot(w1_ref[...], x, preferred_element_type=jnp.float32)      # (C + K*ch, nb*hw) fp32
    acc = y[:c_in, :]                                                     # identity-branch contribution
    z = y[c_in:, :].astype(cdt)                                           # stage features, pre-pool

    ups = []
    for b in range(nb):                                                   # static unroll over folded batches
        zb = z[:, b * hw:(b + 1) * hw]                                    # (K*ch, hw), lane-aligned slice
        # Adaptive avg-pool for every stage at once: contract the HW axes (pt lane-dense (S, hw)).
        pooled = jax.lax.dot_general(
            zb, pt_ref[...],
            dimension_numbers=(((1,), (1,)), ((), ())),
            preferred_element_type=jnp.float32)                           # (K*ch, S)
        # Stage bias + in-place ReLU; the 0/1 mask keeps only each stage's own pooled columns.
        r = (jnp.maximum(pooled + bs_ref[...], 0.0) * mask_ref[...]).astype(cdt)
        # Bilinear upsample back to full resolution.
        ups.append(jnp.dot(r, ut_ref[...], preferred_element_type=jnp.float32))  # (K*ch, hw)
    up = ups[0] if nb == 1 else jnp.concatenate(ups, axis=1)              # (K*ch, nb*hw)

    # Bottleneck columns for the priors, then bias + final ReLU (lane-dense store).
    acc = acc + jnp.dot(w2_ref[...], up.astype(cdt), preferred_element_type=jnp.float32)
    o_ref[...] = jnp.maximum(acc + bb_ref[...], 0.0).astype(o_ref.dtype)


def _pick_batch_block(n, hw, target_lanes=1024):
    """Batches folded into the lane axis per grid step.

    Aims for >= `target_lanes` lane-dense columns per matmul (amortizes the ~0.35us
    per-step overhead and MXU weight pushes), but keeps >= 2 "parallel" grid steps
    when N allows so both of a v7x chip's TensorCores get work (v5e/v6e have one TC
    and are indifferent)."""
    if hw % 128 != 0:
        return n   # block must then equal the full array along the lane axis
    nb = max(1, min(n, target_lanes // hw))
    if n >= 2:
        nb = min(nb, max(1, n // 2))
    while n % nb:
        nb -= 1
    return nb


def ppm_forward(x, folded, *, batch_block=None):
    N, C, H, W = x.shape
    HW = H * W
    sizes = folded["sizes"]
    K = len(sizes)
    ch = folded["channels"]
    kch = K * ch
    S = folded["S"]
    cdt = folded["w1"].dtype

    nb = batch_block or _pick_batch_block(N, HW)
    assert N % nb == 0

    # Host-side layout prep (one transpose/reshape outside the kernel): batch folds into
    # the lane-dense last axis so every in-kernel matmul sees nb*HW columns and the output
    # store is an unmasked, lane-dense vst.
    x_flat = jnp.transpose(x.reshape(N, C, HW), (1, 0, 2)).reshape(C, N * HW).astype(cdt)

    consts = (folded["w1"], folded["w2"], folded["bs"], folded["bb"],
              folded["pt"], folded["ut"], folded["mask"])

    flops = N * 2 * HW * ((C + kch) * C + 2 * kch * S + C * kch)
    bytes_accessed = (int(x_flat.size) * x_flat.dtype.itemsize + N * C * HW * 4
                      + sum(int(a.size) * a.dtype.itemsize for a in consts))

    # VMEM budget: double-buffered x/out blocks + constants (worst case double-buffered).
    block_bytes = C * nb * HW * (x_flat.dtype.itemsize + 4) * 2
    const_bytes = sum(int(a.size) * a.dtype.itemsize for a in consts) * 2
    vmem_limit = int(min(64 << 20, max(32 << 20, 2 * (block_bytes + const_bytes))))

    # TODO(synk): for production PPM shapes (C~2048, HW~3600) add grid axes tiling HW (as a
    # reduction axis for the pool contraction, with fp32 scratch accumulators) and C so the
    # per-step residency stays under v7x's 64 MiB VMEM; this single-residency tiling targets
    # feature maps that fit comfortably per step.

    kernel = functools.partial(_ppm_kernel, nb=nb, hw=HW, c_in=C, cdt=cdt)

    def build(single_buffer_consts):
        def const_spec(a):
            kwargs = {}
            if single_buffer_consts:
                kwargs["pipeline_mode"] = pl.Buffered(1)   # fetched once; don't double-buffer
            return pl.BlockSpec(a.shape, lambda i, r=a.ndim: (0,) * r, **kwargs)

        return pl.pallas_call(
            kernel,
            out_shape=jax.ShapeDtypeStruct((C, N * HW), jnp.float32),
            grid=(N // nb,),
            in_specs=[pl.BlockSpec((C, nb * HW), lambda i: (0, i))]
                     + [const_spec(a) for a in consts],
            out_specs=pl.BlockSpec((C, nb * HW), lambda i: (0, i)),
            compiler_params=pltpu.CompilerParams(
                dimension_semantics=("parallel",),
                vmem_limit_bytes=vmem_limit),
            cost_estimate=pl.CostEstimate(flops=int(flops), transcendentals=0,
                                          bytes_accessed=int(bytes_accessed)),
        )

    try:
        out = build(single_buffer_consts=True)(x_flat, *consts)
        jax.block_until_ready(out)
    except Exception:
        # This JAX build rejected pipeline_mode=pl.Buffered(1); fall back to default buffering.
        out = build(single_buffer_consts=False)(x_flat, *consts)

    return jnp.transpose(out.reshape(C, N, HW), (1, 0, 2)).reshape(N, C, H, W)


# ---------------------------------------------------------------------------
# Pure-NumPy float64 reference that mirrors the PyTorch module op-by-op
# (pool -> 1x1 conv -> ReLU -> bilinear up per stage, concat priors+feats, bottleneck, ReLU).
# ---------------------------------------------------------------------------
def ppm_reference(x, params):
    x = np.asarray(x, np.float64)
    N, C, H, W = x.shape
    HW = H * W
    xf = x.reshape(N, C, HW)
    priors = []
    for k, s in enumerate(params["sizes"]):
        P = np.kron(_adaptive_avg_pool_matrix(H, s), _adaptive_avg_pool_matrix(W, s))   # (s*s, HW)
        U = np.kron(_bilinear_upsample_matrix(s, H), _bilinear_upsample_matrix(s, W))   # (HW, s*s)
        w = np.asarray(params["stage_w"][k], np.float64)
        b = np.asarray(params["stage_b"][k], np.float64)
        pooled = np.einsum("nch,ph->ncp", xf, P)
        conv = np.einsum("oc,ncp->nop", w, pooled) + b[None, :, None]
        r = np.maximum(conv, 0.0)
        priors.append(np.einsum("nop,hp->noh", r, U))
    cat = np.concatenate(priors + [xf], axis=1)      # priors first, feats last (PyTorch concat order)
    wb = np.asarray(params["bottleneck_w"], np.float64)
    bbias = np.asarray(params["bottleneck_b"], np.float64)
    out = np.einsum("oc,nch->noh", wb, cat) + bbias[None, :, None]
    return np.maximum(out, 0.0).reshape(N, C, H, W)


if __name__ == "__main__":
    key = jax.random.PRNGKey(0)
    kx, kp = jax.random.split(key)

    # Small NCHW feature map: batch=2, in_channels=8 (-> stage channels 2), 16x16 spatial.
    N, C, H, W = 2, 8, 16, 16
    x = jax.random.normal(kx, (N, C, H, W), dtype=jnp.float32)
    params = init_ppm_params(kp, in_channels=C)          # channels = C // 4 = 2, sizes = (1, 2, 3, 6)

    y_ref = ppm_reference(np.asarray(x), params)         # exact float64 reference

    # fp32 operand path: every op is an exact linear map, so use a tight tolerance
    # (bounded only by the MXU's multi-pass f32 matmul, ~1e-5 relative); any concat-order /
    # slicing / layout bug would produce O(1) errors and fail this check.
    y32 = ppm_forward(x, fold_ppm_params(params, H, W, compute_dtype=jnp.float32))
    jax.block_until_ready(y32)
    assert y32.shape == x.shape and y32.dtype == jnp.float32
    err32 = float(np.max(np.abs(np.asarray(y32, np.float64) - y_ref)))
    assert err32 < 1e-3, f"fp32 path max abs err {err32}"

    # bf16 operand path (MXU-native on v6e/v7x), fp32 accumulation: looser tolerance.
    y16 = ppm_forward(x, fold_ppm_params(params, H, W, compute_dtype=jnp.bfloat16))
    jax.block_until_ready(y16)
    assert y16.shape == x.shape and y16.dtype == jnp.float32
    err16 = float(np.max(np.abs(np.asarray(y16, np.float64) - y_ref)))
    assert err16 < 5e-2, f"bf16 path max abs err {err16}"

    print("KERNEL_OK")
</pallas_src>

<mosaic_0001>
module attributes {stable_mosaic.version = 11 : i64} {
  func.func @_ppm_kernel(%arg0: i32, %arg1: memref<8x256xf32, #tpu.memory_space<vmem>>, %arg2: memref<16x8xf32, #tpu.memory_space<vmem>>, %arg3: memref<8x8xf32, #tpu.memory_space<vmem>>, %arg4: memref<8x1xf32, #tpu.memory_space<vmem>>, %arg5: memref<8x1xf32, #tpu.memory_space<vmem>>, %arg6: memref<50x256xf32, #tpu.memory_space<vmem>>, %arg7: memref<50x256xf32, #tpu.memory_space<vmem>>, %arg8: memref<8x50xf32, #tpu.memory_space<vmem>>, %arg9: memref<8x256xf32, #tpu.memory_space<vmem>>) attributes {dimension_semantics = [#tpu.dimension_semantics<parallel>], iteration_bounds = array<i64: 2>, scalar_prefetch = 0 : i64, scratch_operands = 0 : i64, tpu.core_type = #tpu.core_type<tc>, window_params = [{transform_indices = @transform_0, window_bounds = array<i64: 8, 256>}, {pipeline_mode = #tpu.pipeline_mode<synchronous>, transform_indices = @transform_1, window_bounds = array<i64: 16, 8>}, {pipeline_mode = #tpu.pipeline_mode<synchronous>, transform_indices = @transform_2, window_bounds = array<i64: 8, 8>}, {pipeline_mode = #tpu.pipeline_mode<synchronous>, transform_indices = @transform_3, window_bounds = array<i64: 8, 1>}, {pipeline_mode = #tpu.pipeline_mode<synchronous>, transform_indices = @transform_4, window_bounds = array<i64: 8, 1>}, {pipeline_mode = #tpu.pipeline_mode<synchronous>, transform_indices = @transform_5, window_bounds = array<i64: 50, 256>}, {pipeline_mode = #tpu.pipeline_mode<synchronous>, transform_indices = @transform_6, window_bounds = array<i64: 50, 256>}, {pipeline_mode = #tpu.pipeline_mode<synchronous>, transform_indices = @transform_7, window_bounds = array<i64: 8, 50>}, {transform_indices = @transform_8, window_bounds = array<i64: 8, 256>}]} {
    %c0 = arith.constant 0 : index
    %c0_0 = arith.constant 0 : index
    %0 = vector.load %arg1[%c0, %c0_0] : memref<8x256xf32, #tpu.memory_space<vmem>>, vector<8x256xf32>
    %c0_1 = arith.constant 0 : index
    %c0_2 = arith.constant 0 : index
    %1 = vector.load %arg2[%c0_1, %c0_2] : memref<16x8xf32, #tpu.memory_space<vmem>>, vector<16x8xf32>
    %cst = arith.constant dense<0.000000e+00> : vector<16x256xf32>
    %2 = tpu.matmul %1, %0, %cst {dimension_numbers = #tpu.dot_dimension_numbers<[1], [0], [0], [1], [0, 0, 1, 1], [], []>} : vector<16x8xf32>, vector<8x256xf32>, vector<16x256xf32> -> vector<16x256xf32>
    %3 = vector.extract_strided_slice %2 {offsets = [0, 0], sizes = [8, 256], strides = [1, 1]} : vector<16x256xf32> to vector<8x256xf32>
    %4 = vector.extract_strided_slice %2 {offsets = [8, 0], sizes = [8, 256], strides = [1, 1]} : vector<16x256xf32> to vector<8x256xf32>
    %c0_3 = arith.constant 0 : index
    %c0_4 = arith.constant 0 : index
    %5 = vector.load %arg6[%c0_3, %c0_4] : memref<50x256xf32, #tpu.memory_space<vmem>>, vector<50x256xf32>
    %cst_5 = arith.constant dense<0.000000e+00> : vector<8x50xf32>
    %6 = tpu.matmul %4, %5, %cst_5 {dimension_numbers = #tpu.dot_dimension_numbers<[1], [1], [0], [0], [0, 0, 1, 0], [], []>} : vector<8x256xf32>, vector<50x256xf32>, vector<8x50xf32> -> vector<8x50xf32>
    %c0_6 = arith.constant 0 : index
    %c0_7 = arith.constant 0 : index
    %7 = vector.load %arg4[%c0_6, %c0_7] : memref<8x1xf32, #tpu.memory_space<vmem>>, vector<8x1xf32>
    %8 = vector.broadcast %7 : vector<8x1xf32> to vector<8x50xf32>
    %9 = arith.addf %6, %8 : vector<8x50xf32>
    %cst_8 = arith.constant 0.000000e+00 : f32
    %10 = vector.broadcast %cst_8 : f32 to vector<8x50xf32>
    %11 = arith.maximumf %9, %10 : vector<8x50xf32>
    %c0_9 = arith.constant 0 : index
    %c0_10 = arith.constant 0 : index
    %12 = vector.load %arg8[%c0_9, %c0_10] : memref<8x50xf32, #tpu.memory_space<vmem>>, vector<8x50xf32>
    %13 = arith.mulf %11, %12 : vector<8x50xf32>
    %c0_11 = arith.constant 0 : index
    %c0_12 = arith.constant 0 : index
    %14 = vector.load %arg7[%c0_11, %c0_12] : memref<50x256xf32, #tpu.memory_space<vmem>>, vector<50x256xf32>
    %cst_13 = arith.constant dense<0.000000e+00> : vector<8x256xf32>
    %15 = tpu.matmul %13, %14, %cst_13 {dimension_numbers = #tpu.dot_dimension_numbers<[1], [0], [0], [1], [0, 0, 1, 1], [], []>} : vector<8x50xf32>, vector<50x256xf32>, vector<8x256xf32> -> vector<8x256xf32>
    %c0_14 = arith.constant 0 : index
    %c0_15 = arith.constant 0 : index
    %16 = vector.load %arg3[%c0_14, %c0_15] : memref<8x8xf32, #tpu.memory_space<vmem>>, vector<8x8xf32>
    %cst_16 = arith.constant dense<0.000000e+00> : vector<8x256xf32>
    %17 = tpu.matmul %16, %15, %cst_16 {dimension_numbers = #tpu.dot_dimension_numbers<[1], [0], [0], [1], [0, 0, 1, 1], [], []>} : vector<8x8xf32>, vector<8x256xf32>, vector<8x256xf32> -> vector<8x256xf32>
    %18 = arith.addf %3, %17 : vector<8x256xf32>
    %c0_17 = arith.constant 0 : index
    %c0_18 = arith.constant 0 : index
    %19 = vector.load %arg5[%c0_17, %c0_18] : memref<8x1xf32, #tpu.memory_space<vmem>>, vector<8x1xf32>
    %20 = vector.broadcast %19 : vector<8x1xf32> to vector<8x256xf32>
    %21 = arith.addf %18, %20 : vector<8x256xf32>
    %cst_19 = arith.constant 0.000000e+00 : f32
    %22 = vector.broadcast %cst_19 : f32 to vector<8x256xf32>
    %23 = arith.maximumf %21, %22 : vector<8x256xf32>
    %c0_20 = arith.constant 0 : index
    %c0_21 = arith.constant 0 : index
    %24 = vector.load %arg9[%c0_20, %c0_21] : memref<8x256xf32, #tpu.memory_space<vmem>>, vector<8x256xf32>
    tpu.vector_store %arg9[%c0_20, %c0_21], %23 {strides = array<i32>} : memref<8x256xf32, #tpu.memory_space<vmem>>, vector<8x256xf32>,
    return
  }
  func.func @transform_0(%arg0: i32) -> (i32, i32) {
    %c0_i32 = arith.constant 0 : i32
    %c0_i32_0 = arith.constant 0 : i32
    return %c0_i32, %arg0 : i32, i32
  }
  func.func @transform_1(%arg0: i32) -> (i32, i32) {
    %c0_i32 = arith.constant 0 : i32
    %c0_i32_0 = arith.constant 0 : i32
    %c0_i32_1 = arith.constant 0 : i32
    return %c0_i32, %c0_i32_0 : i32, i32
  }
  func.func @transform_2(%arg0: i32) -> (i32, i32) {
    %c0_i32 = arith.constant 0 : i32
    %c0_i32_0 = arith.constant 0 : i32
    %c0_i32_1 = arith.constant 0 : i32
    return %c0_i32, %c0_i32_0 : i32, i32
  }
  func.func @transform_3(%arg0: i32) -> (i32, i32) {
    %c0_i32 = arith.constant 0 : i32
    %c0_i32_0 = arith.constant 0 : i32
    %c0_i32_1 = arith.constant 0 : i32
    return %c0_i32, %c0_i32_0 : i32, i32
  }
  func.func @transform_4(%arg0: i32) -> (i32, i32) {
    %c0_i32 = arith.constant 0 : i32
    %c0_i32_0 = arith.constant 0 : i32
    %c0_i32_1 = arith.constant 0 : i32
    return %c0_i32, %c0_i32_0 : i32, i32
  }
  func.func @transform_5(%arg0: i32) -> (i32, i32) {
    %c0_i32 = arith.constant 0 : i32
    %c0_i32_0 = arith.constant 0 : i32
    %c0_i32_1 = arith.constant 0 : i32
    return %c0_i32, %c0_i32_0 : i32, i32
  }
  func.func @transform_6(%arg0: i32) -> (i32, i32) {
    %c0_i32 = arith.constant 0 : i32
    %c0_i32_0 = arith.constant 0 : i32
    %c0_i32_1 = arith.constant 0 : i32
    return %c0_i32, %c0_i32_0 : i32, i32
  }
  func.func @transform_7(%arg0: i32) -> (i32, i32) {
    %c0_i32 = arith.constant 0 : i32
    %c0_i32_0 = arith.constant 0 : i32
    %c0_i32_1 = arith.constant 0 : i32
    return %c0_i32, %c0_i32_0 : i32, i32
  }
  func.func @transform_8(%arg0: i32) -> (i32, i32) {
    %c0_i32 = arith.constant 0 : i32
    %c0_i32_0 = arith.constant 0 : i32
    return %c0_i32, %arg0 : i32, i32
  }
}

module attributes {stable_mosaic.version = 11 : i64} {
  func.func @_ppm_kernel(%arg0: i32, %arg1: memref<8x256xf32, #tpu.memory_space<vmem>>, %arg2: memref<16x8xf32, #tpu.memory_space<vmem>>, %arg3: memref<8x8xf32, #tpu.memory_space<vmem>>, %arg4: memref<8x1xf32, #tpu.memory_space<vmem>>, %arg5: memref<8x1xf32, #tpu.memory_space<vmem>>, %arg6: memref<50x256xf32, #tpu.memory_space<vmem>>, %arg7: memref<50x256xf32, #tpu.memory_space<vmem>>, %arg8: memref<8x50xf32, #tpu.memory_space<vmem>>, %arg9: memref<8x256xf32, #tpu.memory_space<vmem>>) attributes {dimension_semantics = [#tpu.dimension_semantics<parallel>], iteration_bounds = array<i64: 2>, scalar_prefetch = 0 : i64, scratch_operands = 0 : i64, tpu.core_type = #tpu.core_type<tc>, window_params = [{transform_indices = @transform_0, window_bounds = array<i64: 8, 256>}, {pipeline_mode = #tpu.pipeline_mode<synchronous>, transform_indices = @transform_1, window_bounds = array<i64: 16, 8>}, {pipeline_mode = #tpu.pipeline_mode<synchronous>, transform_indices = @transform_2, window_bounds = array<i64: 8, 8>}, {pipeline_mode = #tpu.pipeline_mode<synchronous>, transform_indices = @transform_3, window_bounds = array<i64: 8, 1>}, {pipeline_mode = #tpu.pipeline_mode<synchronous>, transform_indices = @transform_4, window_bounds = array<i64: 8, 1>}, {pipeline_mode = #tpu.pipeline_mode<synchronous>, transform_indices = @transform_5, window_bounds = array<i64: 50, 256>}, {pipeline_mode = #tpu.pipeline_mode<synchronous>, transform_indices = @transform_6, window_bounds = array<i64: 50, 256>}, {pipeline_mode = #tpu.pipeline_mode<synchronous>, transform_indices = @transform_7, window_bounds = array<i64: 8, 50>}, {transform_indices = @transform_8, window_bounds = array<i64: 8, 256>}]} {
    %c0 = arith.constant 0 : index
    %c0_0 = arith.constant 0 : index
    %0 = vector.load %arg1[%c0, %c0_0] : memref<8x256xf32, #tpu.memory_space<vmem>>, vector<8x256xf32>
    %c0_1 = arith.constant 0 : index
    %c0_2 = arith.constant 0 : index
    %1 = vector.load %arg2[%c0_1, %c0_2] : memref<16x8xf32, #tpu.memory_space<vmem>>, vector<16x8xf32>
    %cst = arith.constant dense<0.000000e+00> : vector<16x256xf32>
    %2 = tpu.matmul %1, %0, %cst {dimension_numbers = #tpu.dot_dimension_numbers<[1], [0], [0], [1], [0, 0, 1, 1], [], []>} : vector<16x8xf32>, vector<8x256xf32>, vector<16x256xf32> -> vector<16x256xf32>
    %3 = vector.extract_strided_slice %2 {offsets = [0, 0], sizes = [8, 256], strides = [1, 1]} : vector<16x256xf32> to vector<8x256xf32>
    %4 = vector.extract_strided_slice %2 {offsets = [8, 0], sizes = [8, 256], strides = [1, 1]} : vector<16x256xf32> to vector<8x256xf32>
    %c0_3 = arith.constant 0 : index
    %c0_4 = arith.constant 0 : index
    %5 = vector.load %arg6[%c0_3, %c0_4] : memref<50x256xf32, #tpu.memory_space<vmem>>, vector<50x256xf32>
    %cst_5 = arith.constant dense<0.000000e+00> : vector<8x50xf32>
    %6 = tpu.matmul %4, %5, %cst_5 {dimension_numbers = #tpu.dot_dimension_numbers<[1], [1], [0], [0], [0, 0, 1, 0], [], []>} : vector<8x256xf32>, vector<50x256xf32>, vector<8x50xf32> -> vector<8x50xf32>
    %c0_6 = arith.constant 0 : index
    %c0_7 = arith.constant 0 : index
    %7 = vector.load %arg4[%c0_6, %c0_7] : memref<8x1xf32, #tpu.memory_space<vmem>>, vector<8x1xf32>
    %8 = vector.broadcast %7 : vector<8x1xf32> to vector<8x50xf32>
    %9 = arith.addf %6, %8 : vector<8x50xf32>
    %cst_8 = arith.constant 0.000000e+00 : f32
    %10 = vector.broadcast %cst_8 : f32 to vector<8x50xf32>
    %11 = arith.maximumf %9, %10 : vector<8x50xf32>
    %c0_9 = arith.constant 0 : index
    %c0_10 = arith.constant 0 : index
    %12 = vector.load %arg8[%c0_9, %c0_10] : memref<8x50xf32, #tpu.memory_space<vmem>>, vector<8x50xf32>
    %13 = arith.mulf %11, %12 : vector<8x50xf32>
    %c0_11 = arith.constant 0 : index
    %c0_12 = arith.constant 0 : index
    %14 = vector.load %arg7[%c0_11, %c0_12] : memref<50x256xf32, #tpu.memory_space<vmem>>, vector<50x256xf32>
    %cst_13 = arith.constant dense<0.000000e+00> : vector<8x256xf32>
    %15 = tpu.matmul %13, %14, %cst_13 {dimension_numbers = #tpu.dot_dimension_numbers<[1], [0], [0], [1], [0, 0, 1, 1], [], []>} : vector<8x50xf32>, vector<50x256xf32>, vector<8x256xf32> -> vector<8x256xf32>
    %c0_14 = arith.constant 0 : index
    %c0_15 = arith.constant 0 : index
    %16 = vector.load %arg3[%c0_14, %c0_15] : memref<8x8xf32, #tpu.memory_space<vmem>>, vector<8x8xf32>
    %cst_16 = arith.constant dense<0.000000e+00> : vector<8x256xf32>
    %17 = tpu.matmul %16, %15, %cst_16 {dimension_numbers = #tpu.dot_dimension_numbers<[1], [0], [0], [1], [0, 0, 1, 1], [], []>} : vector<8x8xf32>, vector<8x256xf32>, vector<8x256xf32> -> vector<8x256xf32>
    %18 = arith.addf %3, %17 : vector<8x256xf32>
    %c0_17 = arith.constant 0 : index
    %c0_18 = arith.constant 0 : index
    %19 = vector.load %arg5[%c0_17, %c0_18] : memref<8x1xf32, #tpu.memory_space<vmem>>, vector<8x1xf32>
    %20 = vector.broadcast %19 : vector<8x1xf32> to vector<8x256xf32>
    %21 = arith.addf %18, %20 : vector<8x256xf32>
    %cst_19 = arith.constant 0.000000e+00 : f32
    %22 = vector.broadcast %cst_19 : f32 to vector<8x256xf32>
    %23 = arith.maximumf %21, %22 : vector<8x256xf32>
    %c0_20 = arith.constant 0 : index
    %c0_21 = arith.constant 0 : index
    %24 = vector.load %arg9[%c0_20, %c0_21] : memref<8x256xf32, #tpu.memory_space<vmem>>, vector<8x256xf32>
    tpu.vector_store %arg9[%c0_20, %c0_21], %23 {strides = array<i32>} : memref<8x256xf32, #tpu.memory_space<vmem>>, vector<8x256xf32>,
    return
  }
  func.func @transform_0(%arg0: i32) -> (i32, i32) {
    %c0_i32 = arith.constant 0 : i32
    %c0_i32_0 = arith.constant 0 : i32
    return %c0_i32, %arg0 : i32, i32
  }
  func.func @transform_1(%arg0: i32) -> (i32, i32) {
    %c0_i32 = arith.constant 0 : i32
    %c0_i32_0 = arith.constant 0 : i32
    %c0_i32_1 = arith.constant 0 : i32
    return %c0_i32, %c0_i32_0 : i32, i32
  }
  func.func @transform_2(%arg0: i32) -> (i32, i32) {
    %c0_i32 = arith.constant 0 : i32
    %c0_i32_0 = arith.constant 0 : i32
    %c0_i32_1 = arith.constant 0 : i32
    return %c0_i32, %c0_i32_0 : i32, i32
  }
  func.func @transform_3(%arg0: i32) -> (i32, i32) {
    %c0_i32 = arith.constant 0 : i32
    %c0_i32_0 = arith.constant 0 : i32
    %c0_i32_1 = arith.constant 0 : i32
    return %c0_i32, %c0_i32_0 : i32, i32
  }
  func.func @transform_4(%arg0: i32) -> (i32, i32) {
    %c0_i32 = arith.constant 0 : i32
    %c0_i32_0 = arith.constant 0 : i32
    %c0_i32_1 = arith.constant 0 : i32
    return %c0_i32, %c0_i32_0 : i32, i32
  }
  func.func @transform_5(%arg0: i32) -> (i32, i32) {
    %c0_i32 = arith.constant 0 : i32
    %c0_i32_0 = arith.constant 0 : i32
    %c0_i32_1 = arith.constant 0 : i32
    return %c0_i32, %c0_i32_0 : i32, i32
  }
  func.func @transform_6(%arg0: i32) -> (i32, i32) {
    %c0_i32 = arith.constant 0 : i32
    %c0_i32_0 = arith.constant 0 : i32
    %c0_i32_1 = arith.constant 0 : i32
    return %c0_i32, %c0_i32_0 : i32, i32
  }
  func.func @transform_7(%arg0: i32) -> (i32, i32) {
    %c0_i32 = arith.constant 0 : i32
    %c0_i32_0 = arith.constant 0 : i32
    %c0_i32_1 = arith.constant 0 : i32
    return %c0_i32, %c0_i32_0 : i32, i32
  }
  func.func @transform_8(%arg0: i32) -> (i32, i32) {
    %c0_i32 = arith.constant 0 : i32
    %c0_i32_0 = arith.constant 0 : i32
    return %c0_i32, %arg0 : i32, i32
  }
}

</mosaic_0001>

<llo_original>
// kernel: tpu_custom_call.1
$region0: #{tpu_custom_call.1}
  #allocation0 [shape = 'u32[]', space=smem, size = 0x4, offset = 0x4, fixed_abs, tag = 'smem constant byte address 0x4 - core index']
  #allocation1 [shape = 'u32[144,128]{1,0:T(1,128)}', space=vmem, size = 0x12000, scoped, tag = 'internal scratch']
  %s0 = inlined_call_operand.vmem [shape: f32[8,512], index: 0, kind: input, shape index: {}]
  %s1 = inlined_call_operand.vmem [shape: f32[16,8], index: 1, kind: input, shape index: {}]
  %s2 = inlined_call_operand.vmem [shape: f32[8,8], index: 2, kind: input, shape index: {}]
  %s3 = inlined_call_operand.vmem [shape: f32[8,1], index: 3, kind: input, shape index: {}]
  %s4 = inlined_call_operand.vmem [shape: f32[8,1], index: 4, kind: input, shape index: {}]
  %s5 = inlined_call_operand.hbm [shape: f32[50,256], index: 5, kind: input, shape index: {}]
  %s6 = inlined_call_operand.hbm [shape: f32[50,256], index: 6, kind: input, shape index: {}]
  %s7 = inlined_call_operand.vmem [shape: f32[8,50], index: 7, kind: input, shape index: {}]
  %s8 = inlined_call_operand.hbm [shape: f32[8,512], index: 8, kind: output, shape index: {}]
  %s9 = sld [smem:[#allocation0]]
  $region73: #{tpu_custom_call.1} parent=0
    _
  %s11 = ssub.s32 1, %s9
  %s12 = scalar_select 0, %s11, %s9
  $region1: #{tpu_custom_call.1} parent=0
    #allocation2 [shape = 'u8[57344]{0}', space=vmem, size = 0xe000, scoped, tag = 'input window, operand 5, single buffered']
    #allocation3 [shape = 's32[2]{0}', space=sflag, size = 0x8, scoped, tag = 'scoped memory for tpu_custom_call.1']
    #allocation4 [shape = 's32[2]{0}', space=sflag, size = 0x8, scoped, tag = 'scoped memory for tpu_custom_call.1']
    #allocation5 [shape = 'u8[57344]{0}', space=vmem, size = 0xe000, scoped, tag = 'input window, operand 6, single buffered']
    #allocation6 [shape = 's32[1]{0}', space=sflag, size = 0x4, scoped, tag = 'scoped memory for tpu_custom_call.1']
    #allocation7 [shape = 'u8[16384]{0}', space=vmem, size = 0x4000, scoped, tag = 'output window, operand 0']
    %13 = vsyncpa [#allocation3], 0
    %14 = vsyncpa [#allocation6], 0
    %15 = vsyncpa [#allocation4], 0
    %s16 = scalar_lea.sflag [#allocation4], 1
    %17 = vsyncpa %s16, 0
    loop: start=0, step=1, limit=4
    $region2: #{tpu_custom_call.1} parent=1 // loop_pre_header
      _
    $region3: #{tpu_custom_call.1} parent=1 // loop_header
      %s19 = sphi 0, %s23
      %p20 = scmp.ge.s32.totalorder %s19, 4
      %s29 = sphi 0, %s31
      %s32 = sphi 0, %s29
      %s33 = sphi 0, %s32
      %s49 = sphi 0, %s33
      %s53 = sphi 0, %s53
      %s55 = sphi 0, %s53
      %s56 = sphi 0, %s55
      %s70 = sphi 0, %s56
      %s74 = sphi 0, %s74
      %s76 = sphi 0, %s74
      %s77 = sphi 0, %s76
      %s91 = sphi 0, %s77
      %s95 = sphi 0, %s95
      %s97 = sphi 0, %s95
      %s98 = sphi 0, %s97
      %s112 = sphi 0, %s98
      %s116 = sphi 0, %s116
      %s118 = sphi 0, %s116
      %s119 = sphi 0, %s118
      %s133 = sphi 0, %s119
      %s137 = sphi 0, %s137
      %s139 = sphi 0, %s137
      %s140 = sphi 0, %s139
      %s154 = sphi 0, %s140
      %s158 = sphi 0, %s158
      %s160 = sphi 0, %s158
      %s161 = sphi 0, %s160
      %s175 = sphi 0, %s161
      %s179 = sphi 0, %s179
      %s181 = sphi 0, %s179
      %s182 = sphi 0, %s181
      %s196 = sphi 0, %s182
      %s202 = sphi 0, %s204
      %s205 = sphi 0, %s202
      %s206 = sphi 0, %s205
      %s222 = sphi 0, %s206
    $region4: #{tpu_custom_call.1} parent=1 // loop_header_branch
      %22 = sbr.rel (%p20) target = $region8
    $region5: #{tpu_custom_call.1} parent=1 // loop_body
      %s24 = ssub.s32 %s19, 1
      %s25 = ssub.s32 %s19, 2
      %s26 = sadd.s32 %s19, 1
      %s27 = ssub.s32 %s19, %s26
      %p28 = scmp.eq.s32.totalorder %s27, 0
      %s30 = sadd.s32 %s29, 1
      %s31 = scalar_select %p28, %s29, %s30
      %p34 = pneg %p28
      %p35 = scmp.eq.s32.totalorder %s19, 1
      %p36 = por %p34, %p35
      %p37 = scmp.ne.s32.totalorder %s29, %s32
      %p38 = scmp.eq.s32.totalorder %s19, 0
      %p39 = por %p37, %p38
      %p40 = scmp.ne.s32.totalorder %s29, %s32
      %p41 = scmp.eq.s32.totalorder %s24, 1
      %p42 = por %p40, %p41
      %p43 = scmp.ne.s32.totalorder %s32, %s33
      %p44 = scmp.eq.s32.totalorder %s24, 0
      %p45 = por %p43, %p44
      %p46 = scmp.ne.s32.totalorder %s32, %s33
      %p47 = scmp.eq.s32.totalorder %s25, 1
      %p48 = por %p46, %p47
      %p50 = scmp.ne.s32.totalorder %s33, %s49
      %p51 = scmp.eq.s32.totalorder %s25, 0
      %p52 = por %p50, %p51
      %s54 = sadd.s32 %s53, 1
      %p57 = scmp.eq.s32.totalorder %s19, 1
      %p58 = scmp.ne.s32.totalorder %s53, %s55
      %p59 = scmp.eq.s32.totalorder %s19, 0
      %p60 = por %p58, %p59
      %p61 = scmp.ne.s32.totalorder %s53, %s55
      %p62 = scmp.eq.s32.totalorder %s24, 1
      %p63 = por %p61, %p62
      %p64 = scmp.ne.s32.totalorder %s55, %s56
      %p65 = scmp.eq.s32.totalorder %s24, 0
      %p66 = por %p64, %p65
      %p67 = scmp.ne.s32.totalorder %s55, %s56
      %p68 = scmp.eq.s32.totalorder %s25, 1
      %p69 = por %p67, %p68
      %p71 = scmp.ne.s32.totalorder %s56, %s70
      %p72 = scmp.eq.s32.totalorder %s25, 0
      %p73 = por %p71, %p72
      %s75 = sadd.s32 %s74, 1
      %p78 = scmp.eq.s32.totalorder %s19, 1
      %p79 = scmp.ne.s32.totalorder %s74, %s76
      %p80 = scmp.eq.s32.totalorder %s19, 0
      %p81 = por %p79, %p80
      %p82 = scmp.ne.s32.totalorder %s74, %s76
      %p83 = scmp.eq.s32.totalorder %s24, 1
      %p84 = por %p82, %p83
      %p85 = scmp.ne.s32.totalorder %s76, %s77
      %p86 = scmp.eq.s32.totalorder %s24, 0
      %p87 = por %p85, %p86
      %p88 = scmp.ne.s32.totalorder %s76, %s77
      %p89 = scmp.eq.s32.totalorder %s25, 1
      %p90 = por %p88, %p89
      %p92 = scmp.ne.s32.totalorder %s77, %s91
      %p93 = scmp.eq.s32.totalorder %s25, 0
      %p94 = por %p92, %p93
      %s96 = sadd.s32 %s95, 1
      %p99 = scmp.eq.s32.totalorder %s19, 1
      %p100 = scmp.ne.s32.totalorder %s95, %s97
      %p101 = scmp.eq.s32.totalorder %s19, 0
      %p102 = por %p100, %p101
      %p103 = scmp.ne.s32.totalorder %s95, %s97
      %p104 = scmp.eq.s32.totalorder %s24, 1
      %p105 = por %p103, %p104
      %p106 = scmp.ne.s32.totalorder %s97, %s98
      %p107 = scmp.eq.s32.totalorder %s24, 0
      %p108 = por %p106, %p107
      %p109 = scmp.ne.s32.totalorder %s97, %s98
      %p110 = scmp.eq.s32.totalorder %s25, 1
      %p111 = por %p109, %p110
      %p113 = scmp.ne.s32.totalorder %s98, %s112
      %p114 = scmp.eq.s32.totalorder %s25, 0
      %p115 = por %p113, %p114
      %s117 = sadd.s32 %s116, 1
      %p120 = scmp.eq.s32.totalorder %s19, 1
      %p121 = scmp.ne.s32.totalorder %s116, %s118
      %p122 = scmp.eq.s32.totalorder %s19, 0
      %p123 = por %p121, %p122
      %p124 = scmp.ne.s32.totalorder %s116, %s118
      %p125 = scmp.eq.s32.totalorder %s24, 1
      %p126 = por %p124, %p125
      %p127 = scmp.ne.s32.totalorder %s118, %s119
      %p128 = scmp.eq.s32.totalorder %s24, 0
      %p129 = por %p127, %p128
      %p130 = scmp.ne.s32.totalorder %s118, %s119
      %p131 = scmp.eq.s32.totalorder %s25, 1
      %p132 = por %p130, %p131
      %p134 = scmp.ne.s32.totalorder %s119, %s133
      %p135 = scmp.eq.s32.totalorder %s25, 0
      %p136 = por %p134, %p135
      %s138 = sadd.s32 %s137, 1
      %p141 = scmp.eq.s32.totalorder %s19, 1
      %p142 = scmp.ne.s32.totalorder %s137, %s139
      %p143 = scmp.eq.s32.totalorder %s19, 0
      %p144 = por %p142, %p143
      %p145 = scmp.ne.s32.totalorder %s137, %s139
      %p146 = scmp.eq.s32.totalorder %s24, 1
      %p147 = por %p145, %p146
      %p148 = scmp.ne.s32.totalorder %s139, %s140
      %p149 = scmp.eq.s32.totalorder %s24, 0
      %p150 = por %p148, %p149
      %p151 = scmp.ne.s32.totalorder %s139, %s140
      %p152 = scmp.eq.s32.totalorder %s25, 1
      %p153 = por %p151, %p152
      %p155 = scmp.ne.s32.totalorder %s140, %s154
      %p156 = scmp.eq.s32.totalorder %s25, 0
      %p157 = por %p155, %p156
      %s159 = sadd.s32 %s158, 1
      %p162 = scmp.eq.s32.totalorder %s19, 1
      %p163 = scmp.ne.s32.totalorder %s158, %s160
      %p164 = scmp.eq.s32.totalorder %s19, 0
      %p165 = por %p163, %p164
      %p166 = scmp.ne.s32.totalorder %s158, %s160
      %p167 = scmp.eq.s32.totalorder %s24, 1
      %p168 = por %p166, %p167
      %p169 = scmp.ne.s32.totalorder %s160, %s161
      %p170 = scmp.eq.s32.totalorder %s24, 0
      %p171 = por %p169, %p170
      %p172 = scmp.ne.s32.totalorder %s160, %s161
      %p173 = scmp.eq.s32.totalorder %s25, 1
      %p174 = por %p172, %p173
      %p176 = scmp.ne.s32.totalorder %s161, %s175
      %p177 = scmp.eq.s32.totalorder %s25, 0
      %p178 = por %p176, %p177
      %s180 = sadd.s32 %s179, 1
      %p183 = scmp.eq.s32.totalorder %s19, 1
      %p184 = scmp.ne.s32.totalorder %s179, %s181
      %p185 = scmp.eq.s32.totalorder %s19, 0
      %p186 = por %p184, %p185
      %p187 = scmp.ne.s32.totalorder %s179, %s181
      %p188 = scmp.eq.s32.totalorder %s24, 1
      %p189 = por %p187, %p188
      %p190 = scmp.ne.s32.totalorder %s181, %s182
      %p191 = scmp.eq.s32.totalorder %s24, 0
      %p192 = por %p190, %p191
      %p193 = scmp.ne.s32.totalorder %s181, %s182
      %p194 = scmp.eq.s32.totalorder %s25, 1
      %p195 = por %p193, %p194
      %p197 = scmp.ne.s32.totalorder %s182, %s196
      %p198 = scmp.eq.s32.totalorder %s25, 0
      %p199 = por %p197, %p198
      %s200 = ssub.s32 %s19, %s26
      %p201 = scmp.eq.s32.totalorder %s200, 0
      %s203 = sadd.s32 %s202, 1
      %s204 = scalar_select %p201, %s202, %s203
      %p207 = pneg %p201
      %p208 = scmp.eq.s32.totalorder %s19, 1
      %p209 = por %p207, %p208
      %p210 = scmp.ne.s32.totalorder %s202, %s205
      %p211 = scmp.eq.s32.totalorder %s19, 0
      %p212 = por %p210, %p211
      %p213 = scmp.ne.s32.totalorder %s202, %s205
      %p214 = scmp.eq.s32.totalorder %s24, 1
      %p215 = por %p213, %p214
      %p216 = scmp.ne.s32.totalorder %s205, %s206
      %p217 = scmp.eq.s32.totalorder %s24, 0
      %p218 = por %p216, %p217
      %p219 = scmp.ne.s32.totalorder %s205, %s206
      %p220 = scmp.eq.s32.totalorder %s25, 1
      %p221 = por %p219, %p220
      %p223 = scmp.ne.s32.totalorder %s206, %s222
      %p224 = scmp.eq.s32.totalorder %s25, 0
      %p225 = por %p223, %p224
      %p226 = scmp.le.s32.totalorder 1, %s19
      %p227 = scmp.lt.s32.totalorder %s19, 3
      %p228 = pnand %p226, %p227
      %p229 = pneg %p228
      // Predicated region
      $region9: #{tpu_custom_call.1} parent=5 // pred_check
        _
      $region10: #{tpu_custom_call.1} parent=5 // pred_check_branch
        %231 = sbr.rel (%p228) target = $region12
      $region11: #{tpu_custom_call.1} parent=5 // pred_region
        %s232 = ssub.s32 %s19, 1
        // Predicated region
        $region13: #{tpu_custom_call.1} parent=11 // pred_check
          %p233 = pneg %p66
        $region14: #{tpu_custom_call.1} parent=11 // pred_check_branch
          %235 = sbr.rel (%p233) target = $region16
        $region15: #{tpu_custom_call.1} parent=11 // pred_region
          _
        $region16: #{tpu_custom_call.1} parent=11 // pred_fallthru
          _
        // Predicated region
        $region17: #{tpu_custom_call.1} parent=11 // pred_check
          %p236 = pneg %p87
        $region18: #{tpu_custom_call.1} parent=11 // pred_check_branch
          %238 = sbr.rel (%p236) target = $region20
        $region19: #{tpu_custom_call.1} parent=11 // pred_region
          _
        $region20: #{tpu_custom_call.1} parent=11 // pred_fallthru
          _
        // Predicated region
        $region21: #{tpu_custom_call.1} parent=11 // pred_check
          %p239 = pneg %p108
        $region22: #{tpu_custom_call.1} parent=11 // pred_check_branch
          %241 = sbr.rel (%p239) target = $region24
        $region23: #{tpu_custom_call.1} parent=11 // pred_region
          _
        $region24: #{tpu_custom_call.1} parent=11 // pred_fallthru
          _
        // Predicated region
        $region25: #{tpu_custom_call.1} parent=11 // pred_check
          %p242 = pneg %p129
        $region26: #{tpu_custom_call.1} parent=11 // pred_check_branch
          %244 = sbr.rel (%p242) target = $region28
        $region27: #{tpu_custom_call.1} parent=11 // pred_region
          _
        $region28: #{tpu_custom_call.1} parent=11 // pred_fallthru
          _
        // Predicated region
        $region29: #{tpu_custom_call.1} parent=11 // pred_check
          %p245 = pneg %p150
        $region30: #{tpu_custom_call.1} parent=11 // pred_check_branch
          %247 = sbr.rel (%p245) target = $region32
        $region31: #{tpu_custom_call.1} parent=11 // pred_region
          %s249 = ssub.s32 1792, 1792
          %250 = vsyncadd [#allocation3], %s249
          %s251 = sshll.u32 [#allocation2], 4
          %s252 = int_to_ptr.vmem [resolvable:$true] %s251
          %257 = dma.hbm_to_vmem [thread:$0]  %s5, 1792, %s252, [#allocation3], 256, 256, 16
        $region32: #{tpu_custom_call.1} parent=11 // pred_fallthru
          _
        // Predicated region
        $region33: #{tpu_custom_call.1} parent=11 // pred_check
          %p258 = pneg %p171
        $region34: #{tpu_custom_call.1} parent=11 // pred_check_branch
          %260 = sbr.rel (%p258) target = $region36
        $region35: #{tpu_custom_call.1} parent=11 // pred_region
          %s262 = ssub.s32 1792, 1792
          %263 = vsyncadd [#allocation6], %s262
          %s264 = sshll.u32 [#allocation5], 4
          %s265 = int_to_ptr.vmem [resolvable:$true] %s264
          %270 = dma.hbm_to_vmem [thread:$0]  %s6, 1792, %s265, [#allocation6], 256, 256, 16
        $region36: #{tpu_custom_call.1} parent=11 // pred_fallthru
          _
        // Predicated region
        $region37: #{tpu_custom_call.1} parent=11 // pred_check
          %p271 = pneg %p192
        $region38: #{tpu_custom_call.1} parent=11 // pred_check_branch
          %273 = sbr.rel (%p271) target = $region40
        $region39: #{tpu_custom_call.1} parent=11 // pred_region
          _
        $region40: #{tpu_custom_call.1} parent=11 // pred_fallthru
          _
      $region12: #{tpu_custom_call.1} parent=5 // pred_fallthru
        _
      %p274 = scmp.lt.s32.totalorder %s19, 2
      // Predicated region
      $region41: #{tpu_custom_call.1} parent=5 // pred_check
        %p275 = pneg %p274
      $region42: #{tpu_custom_call.1} parent=5 // pred_check_branch
        %277 = sbr.rel (%p275) target = $region44
      $region43: #{tpu_custom_call.1} parent=5 // pred_region
        // Predicated region
        $region45: #{tpu_custom_call.1} parent=43 // pred_check
          %p278 = pneg %p39
        $region46: #{tpu_custom_call.1} parent=43 // pred_check_branch
          %280 = sbr.rel (%p278) target = $region48
        $region47: #{tpu_custom_call.1} parent=43 // pred_region
          %s281 = smul.u32 2, %s19
          %p282 = scmp.lt.s32.totalorder %s281, 3
          %s283 = scalar_select %p282, %s281, 3
          %s284 = smul.addr %s283, 8
          %s285 = scalar_lea.vmem %s0, %s284
          %s286 = smul.u32 2, %s19
        $region48: #{tpu_custom_call.1} parent=43 // pred_fallthru
          _
      $region44: #{tpu_custom_call.1} parent=5 // pred_fallthru
        _
      %p287 = scmp.le.s32.totalorder 1, %s19
      %p288 = scmp.lt.s32.totalorder %s19, 3
      %p289 = pnand %p287, %p288
      %p290 = pneg %p289
      // Predicated region
      $region49: #{tpu_custom_call.1} parent=5 // pred_check
        _
      $region50: #{tpu_custom_call.1} parent=5 // pred_check_branch
        %292 = sbr.rel (%p289) target = $region52
      $region51: #{tpu_custom_call.1} parent=5 // pred_region
        %s293 = ssub.s32 %s19, 1
        // Predicated region
        $region53: #{tpu_custom_call.1} parent=51 // pred_check
          %p294 = pneg %p150
        $region54: #{tpu_custom_call.1} parent=51 // pred_check_branch
          %296 = sbr.rel (%p294) target = $region56
        $region55: #{tpu_custom_call.1} parent=51 // pred_region
          %297 = dma.done [#allocation3], 1792
        $region56: #{tpu_custom_call.1} parent=51 // pred_fallthru
          _
        // Predicated region
        $region57: #{tpu_custom_call.1} parent=51 // pred_check
          %p298 = pneg %p171
        $region58: #{tpu_custom_call.1} parent=51 // pred_check_branch
          %300 = sbr.rel (%p298) target = $region60
        $region59: #{tpu_custom_call.1} parent=51 // pred_region
          %301 = dma.done [#allocation6], 1792
        $region60: #{tpu_custom_call.1} parent=51 // pred_fallthru
          _
        %s302 = smul.u32 2, %s24
        %p303 = scmp.lt.s32.totalorder %s302, 3
        %s304 = scalar_select %p303, %s302, 3
        %s305 = smul.addr %s304, 8
        %s306 = scalar_lea.vmem %s0, %s305
        %p307 = pneg %p45
        %p308 = pneg %p42
        %p309 = pneg %p66
        %p310 = pneg %p63
        %p311 = pneg %p87
        %p312 = pneg %p84
        %p313 = pneg %p108
        %p314 = pneg %p105
        %p315 = pneg %p129
        %p316 = pneg %p126
        %p317 = pneg %p150
        %p318 = pneg %p147
        %p319 = pneg %p171
        %p320 = pneg %p168
        %p321 = pneg %p192
        %p322 = pneg %p189
        %p323 = pneg %p218
        %p324 = pneg %p215
        %s325 = sand.u32 %s205, 1
        %s326 = scalar_lea.sflag [#allocation4], %s325
        %s327 = sand.u32 %s205, 1
        %s328 = smul.addr %s327, 16
        %s329 = scalar_lea.vmem [#allocation7], %s328
        %s330 = smul.u32 2, %s24
        %p331 = scmp.lt.s32.totalorder %s330, 3
        %s332 = scalar_select %p331, %s330, 3
        %s333 = smul.addr %s332, 8
        %s334 = scalar_lea.vmem %s0, %s333
        %s335 = smul.u32 2, %s24
        %s336 = smul.u32 2, %s24
        %v337 = vld [vmem:[%s334] sm:$0xff]
        %v338 = vld [vmem:[%s334 + $0x8] sm:$0xff]
        %v339 = vld [vmem:[%s1] sm:$0xff]
        %v340 = vld [vmem:[%s1 + $0x8] sm:$0xff]
        %vm341 = vcmask 64512
        %v343 = vsel %vm341, %v339, 0
        %v346 = vsel %vm341, %v340, 0
        %348 = vmatprep.subr.mxu0 %v338
        %349 = vmatpush1.msra.mxu0 %v337
        %350 = vmatprep.subr.mxu0 0.0
        %351 = vmatpush1.msra.mxu0 0.0
        %352 = vmatprep.subr.mxu0 0.0
        %353 = vmatpush1.msra.mxu0 0.0
        %354 = vmatprep.subr.mxu0 0.0
        %355 = vmatpush1.msra.mxu0 0.0
        %356 = vmatprep.subr.mxu0 0.0
        %357 = vmatpush1.msra.mxu0 0.0
        %358 = vmatprep.subr.mxu0 0.0
        %359 = vmatpush1.msra.mxu0 0.0
        %360 = vmatprep.subr.mxu0 0.0
        %361 = vmatpush1.msra.mxu0 0.0
        %362 = vmatprep.subr.mxu0 0.0
        %363 = vmatpush1.msra.mxu0 0.0
        %364 = vmatprep.subr.mxu0 0.0
        %365 = vmatpush1.msra.mxu0 0.0
        %366 = vmatprep.subr.mxu0 0.0
        %367 = vmatpush1.msra.mxu0 0.0
        %368 = vmatprep.subr.mxu0 0.0
        %369 = vmatpush1.msra.mxu0 0.0
        %370 = vmatprep.subr.mxu0 0.0
        %371 = vmatpush1.msra.mxu0 0.0
        %372 = vmatprep.subr.mxu0 0.0
        %373 = vmatpush1.msra.mxu0 0.0
        %374 = vmatprep.subr.mxu0 0.0
        %375 = vmatpush1.msra.mxu0 0.0
        %376 = vmatprep.subr.mxu0 0.0
        %377 = vmatpush1.msra.mxu0 0.0
        %378 = vmatprep.subr.mxu0 0.0
        %379 = vmatpush1.msra.mxu0 0.0
        %380 = vmatprep.subr.mxu0 0.0
        %381 = vmatpush1.msra.mxu0 0.0
        %382 = vmatprep.subr.mxu0 0.0
        %383 = vmatpush1.msra.mxu0 0.0
        %384 = vmatprep.subr.mxu0 0.0
        %385 = vmatpush1.msra.mxu0 0.0
        %386 = vmatprep.subr.mxu0 0.0
        %387 = vmatpush1.msra.mxu0 0.0
        %388 = vmatprep.subr.mxu0 0.0
        %389 = vmatpush1.msra.mxu0 0.0
        %390 = vmatprep.subr.mxu0 0.0
        %391 = vmatpush1.msra.mxu0 0.0
        %392 = vmatprep.subr.mxu0 0.0
        %393 = vmatpush1.msra.mxu0 0.0
        %394 = vmatprep.subr.mxu0 0.0
        %395 = vmatpush1.msra.mxu0 0.0
        %396 = vmatprep.subr.mxu0 0.0
        %397 = vmatpush1.msra.mxu0 0.0
        %398 = vmatprep.subr.mxu0 0.0
        %399 = vmatpush1.msra.mxu0 0.0
        %400 = vmatprep.subr.mxu0 0.0
        %401 = vmatpush1.msra.mxu0 0.0
        %402 = vmatprep.subr.mxu0 0.0
        %403 = vmatpush1.msra.mxu0 0.0
        %404 = vmatprep.subr.mxu0 0.0
        %405 = vmatpush1.msra.mxu0 0.0
        %406 = vmatprep.subr.mxu0 0.0
        %407 = vmatpush1.msra.mxu0 0.0
        %408 = vmatprep.subr.mxu0 0.0
        %409 = vmatpush1.msra.mxu0 0.0
        %410 = vmatprep.subr.mxu0 0.0
        %411 = vmatpush1.msra.mxu0 0.0
        %412 = vmatprep.mubr.f32.mxu0 0.0
        %413 = vmatmul.mubr.f32.gmra.mrb[0].mxu0 %v343
        %v414 = vpop.f32.mrb[0].mxu0
        %v415 = vadd.f32 0.0, %v414
        %v416 = vpop.f32.mrb[0].mxu0
        %v417 = vadd.f32 0.0, %v416
        %418 = vmatprep.mubr.f32.mxu0 0.0
        %419 = vmatmul.mubr.f32.gmra.mrb[0].mxu0 %v346
        %v420 = vpop.f32.mrb[0].mxu0
        %v421 = vadd.f32 0.0, %v420
        %v422 = vpop.f32.mrb[0].mxu0
        %v423 = vadd.f32 0.0, %v422
        %424 = vdwg.mxu0
        %v425 = vld [vmem:[#allocation2] sm:$0xff]
        %v426 = vld [vmem:[#allocation2 + $0x8] sm:$0xff]
        %v427 = vld [vmem:[#allocation2 + $0x10] sm:$0xff]
        %v428 = vld [vmem:[#allocation2 + $0x18] sm:$0xff]
        %v429 = vld [vmem:[#allocation2 + $0x20] sm:$0xff]
        %v430 = vld [vmem:[#allocation2 + $0x28] sm:$0xff]
        %v431 = vld [vmem:[#allocation2 + $0x30] sm:$0xff]
        %v432 = vld [vmem:[#allocation2 + $0x38] sm:$0xff]
        %v433 = vld [vmem:[#allocation2 + $0x40] sm:$0xff]
        %v434 = vld [vmem:[#allocation2 + $0x48] sm:$0xff]
        %v435 = vld [vmem:[#allocation2 + $0x50] sm:$0xff]
        %v436 = vld [vmem:[#allocation2 + $0x58] sm:$0xff]
        %v437 = vld [vmem:[#allocation2 + $0x60] sm:$0x3]
        %v438 = vld [vmem:[#allocation2 + $0x68] sm:$0x3]
        %v439 = vld [vmem:[%s3] sm:$0xff]
        %441 = vset.pattern.permute.xlu0 0
        %442 = vperm.xlu0 %441, %v439
        %v443 = vpop.permute.xlu0 %442
        %445 = vmatprep.subr.mxu0 %v426
        %446 = vmatpush1.xpose.msra.mxu0 %v425
        %447 = vmatprep.subr.mxu0 %v428
        %448 = vmatpush1.xpose.msra.mxu0 %v427
        %449 = vmatprep.subr.mxu0 %v430
        %450 = vmatpush1.xpose.msra.mxu0 %v429
        %451 = vmatprep.subr.mxu0 %v432
        %452 = vmatpush1.xpose.msra.mxu0 %v431
        %453 = vmatprep.subr.mxu0 %v434
        %454 = vmatpush1.xpose.msra.mxu0 %v433
        %455 = vmatprep.subr.mxu0 %v436
        %456 = vmatpush1.xpose.msra.mxu0 %v435
        %457 = vmatprep.subr.mxu0 %v438
        %458 = vmatpush1.xpose.msra.mxu0 %v437
        %459 = vmatprep.subr.mxu0 0.0
        %460 = vmatpush1.xpose.msra.mxu0 0.0
        %461 = vmatprep.subr.mxu0 0.0
        %462 = vmatpush1.xpose.msra.mxu0 0.0
        %463 = vmatprep.subr.mxu0 0.0
        %464 = vmatpush1.xpose.msra.mxu0 0.0
        %465 = vmatprep.subr.mxu0 0.0
        %466 = vmatpush1.xpose.msra.mxu0 0.0
        %467 = vmatprep.subr.mxu0 0.0
        %468 = vmatpush1.xpose.msra.mxu0 0.0
        %469 = vmatprep.subr.mxu0 0.0
        %470 = vmatpush1.xpose.msra.mxu0 0.0
        %471 = vmatprep.subr.mxu0 0.0
        %472 = vmatpush1.xpose.msra.mxu0 0.0
        %473 = vmatprep.subr.mxu0 0.0
        %474 = vmatpush1.xpose.msra.mxu0 0.0
        %475 = vmatprep.subr.mxu0 0.0
        %476 = vmatpush1.xpose.msra.mxu0 0.0
        %477 = vmatprep.subr.mxu0 0.0
        %478 = vmatpush1.xpose.msra.mxu0 0.0
        %479 = vmatprep.subr.mxu0 0.0
        %480 = vmatpush1.xpose.msra.mxu0 0.0
        %481 = vmatprep.subr.mxu0 0.0
        %482 = vmatpush1.xpose.msra.mxu0 0.0
        %483 = vmatprep.subr.mxu0 0.0
        %484 = vmatpush1.xpose.msra.mxu0 0.0
        %485 = vmatprep.subr.mxu0 0.0
        %486 = vmatpush1.xpose.msra.mxu0 0.0
        %487 = vmatprep.subr.mxu0 0.0
        %488 = vmatpush1.xpose.msra.mxu0 0.0
        %489 = vmatprep.subr.mxu0 0.0
        %490 = vmatpush1.xpose.msra.mxu0 0.0
        %491 = vmatprep.subr.mxu0 0.0
        %492 = vmatpush1.xpose.msra.mxu0 0.0
        %493 = vmatprep.subr.mxu0 0.0
        %494 = vmatpush1.xpose.msra.mxu0 0.0
        %495 = vmatprep.subr.mxu0 0.0
        %496 = vmatpush1.xpose.msra.mxu0 0.0
        %497 = vmatprep.subr.mxu0 0.0
        %498 = vmatpush1.xpose.msra.mxu0 0.0
        %499 = vmatprep.subr.mxu0 0.0
        %500 = vmatpush1.xpose.msra.mxu0 0.0
        %501 = vmatprep.subr.mxu0 0.0
        %502 = vmatpush1.xpose.msra.mxu0 0.0
        %503 = vmatprep.subr.mxu0 0.0
        %504 = vmatpush1.xpose.msra.mxu0 0.0
        %505 = vmatprep.subr.mxu0 0.0
        %506 = vmatpush1.xpose.msra.mxu0 0.0
        %507 = vmatprep.subr.mxu0 0.0
        %508 = vmatpush1.xpose.msra.mxu0 0.0
        %509 = vmatprep.mubr.f32.mxu0 %v423
        %510 = vmatmul.mubr.f32.gmra.mrb[0].mxu0 %v421
        %v511 = vpop.f32.mrb[0].mxu0
        %v512 = vadd.f32 %v443, %v511
        %v513 = vpop.f32.mrb[0].mxu0
        %514 = vdwg.mxu0
        %v515 = vmax.f32 %v512, 0.0
        %v516 = vld [vmem:[%s7] sm:$0xff]
        %v517 = vmul.f32 %v515, %v516
        %v518 = vld [vmem:[#allocation5] sm:$0xff]
        %v519 = vld [vmem:[#allocation5 + $0x8] sm:$0xff]
        %v520 = vld [vmem:[#allocation5 + $0x10] sm:$0xff]
        %v521 = vld [vmem:[#allocation5 + $0x18] sm:$0xff]
        %v522 = vld [vmem:[#allocation5 + $0x20] sm:$0xff]
        %v523 = vld [vmem:[#allocation5 + $0x28] sm:$0xff]
        %v524 = vld [vmem:[#allocation5 + $0x30] sm:$0xff]
        %v525 = vld [vmem:[#allocation5 + $0x38] sm:$0xff]
        %v526 = vld [vmem:[#allocation5 + $0x40] sm:$0xff]
        %v527 = vld [vmem:[#allocation5 + $0x48] sm:$0xff]
        %v528 = vld [vmem:[#allocation5 + $0x50] sm:$0xff]
        %v529 = vld [vmem:[#allocation5 + $0x58] sm:$0xff]
        %v530 = vld [vmem:[#allocation5 + $0x60] sm:$0x3]
        %v531 = vld [vmem:[#allocation5 + $0x68] sm:$0x3]
        %vm532 = vcmask 408576
        %v534 = vsel %vm532, %v517, 0
        %vm536 = vcmask 1041408
        %v538 = vsel %vm536, %v530, 0
        %v541 = vsel %vm536, %v531, 0
        %543 = vmatprep.subr.mxu0 %v519
        %544 = vmatpush1.msra.mxu0 %v518
        %545 = vmatprep.subr.mxu0 %v521
        %546 = vmatpush1.msra.mxu0 %v520
        %547 = vmatprep.subr.mxu0 %v523
        %548 = vmatpush1.msra.mxu0 %v522
        %549 = vmatprep.subr.mxu0 %v525
        %550 = vmatpush1.msra.mxu0 %v524
        %551 = vmatprep.subr.mxu0 %v527
        %552 = vmatpush1.msra.mxu0 %v526
        %553 = vmatprep.subr.mxu0 %v529
        %554 = vmatpush1.msra.mxu0 %v528
        %555 = vmatprep.subr.mxu0 %v541
        %556 = vmatpush1.msra.mxu0 %v538
        %557 = vmatprep.subr.mxu0 0.0
        %558 = vmatpush1.msra.mxu0 0.0
        %559 = vmatprep.subr.mxu0 0.0
        %560 = vmatpush1.msra.mxu0 0.0
        %561 = vmatprep.subr.mxu0 0.0
        %562 = vmatpush1.msra.mxu0 0.0
        %563 = vmatprep.subr.mxu0 0.0
        %564 = vmatpush1.msra.mxu0 0.0
        %565 = vmatprep.subr.mxu0 0.0
        %566 = vmatpush1.msra.mxu0 0.0
        %567 = vmatprep.subr.mxu0 0.0
        %568 = vmatpush1.msra.mxu0 0.0
        %569 = vmatprep.subr.mxu0 0.0
        %570 = vmatpush1.msra.mxu0 0.0
        %571 = vmatprep.subr.mxu0 0.0
        %572 = vmatpush1.msra.mxu0 0.0
        %573 = vmatprep.subr.mxu0 0.0
        %574 = vmatpush1.msra.mxu0 0.0
        %575 = vmatprep.subr.mxu0 0.0
        %576 = vmatpush1.msra.mxu0 0.0
        %577 = vmatprep.subr.mxu0 0.0
        %578 = vmatpush1.msra.mxu0 0.0
        %579 = vmatprep.subr.mxu0 0.0
        %580 = vmatpush1.msra.mxu0 0.0
        %581 = vmatprep.subr.mxu0 0.0
        %582 = vmatpush1.msra.mxu0 0.0
        %583 = vmatprep.subr.mxu0 0.0
        %584 = vmatpush1.msra.mxu0 0.0
        %585 = vmatprep.subr.mxu0 0.0
        %586 = vmatpush1.msra.mxu0 0.0
        %587 = vmatprep.subr.mxu0 0.0
        %588 = vmatpush1.msra.mxu0 0.0
        %589 = vmatprep.subr.mxu0 0.0
        %590 = vmatpush1.msra.mxu0 0.0
        %591 = vmatprep.subr.mxu0 0.0
        %592 = vmatpush1.msra.mxu0 0.0
        %593 = vmatprep.subr.mxu0 0.0
        %594 = vmatpush1.msra.mxu0 0.0
        %595 = vmatprep.subr.mxu0 0.0
        %596 = vmatpush1.msra.mxu0 0.0
        %597 = vmatprep.subr.mxu0 0.0
        %598 = vmatpush1.msra.mxu0 0.0
        %599 = vmatprep.subr.mxu0 0.0
        %600 = vmatpush1.msra.mxu0 0.0
        %601 = vmatprep.subr.mxu0 0.0
        %602 = vmatpush1.msra.mxu0 0.0
        %603 = vmatprep.subr.mxu0 0.0
        %604 = vmatpush1.msra.mxu0 0.0
        %605 = vmatprep.subr.mxu0 0.0
        %606 = vmatpush1.msra.mxu0 0.0
        %607 = vmatprep.mubr.f32.mxu0 0.0
        %608 = vmatmul.mubr.f32.gmra.mrb[0].mxu0 %v534
        %v609 = vpop.f32.mrb[0].mxu0
        %v610 = vadd.f32 0.0, %v609
        %v611 = vpop.f32.mrb[0].mxu0
        %v612 = vadd.f32 0.0, %v611
        %613 = vdwg.mxu0
        %v614 = vld [vmem:[%s2] sm:$0xff]
        %v616 = vsel %vm341, %v614, 0
        %618 = vmatprep.subr.mxu0 %v612
        %619 = vmatpush1.msra.mxu0 %v610
        %620 = vmatprep.subr.mxu0 0.0
        %621 = vmatpush1.msra.mxu0 0.0
        %622 = vmatprep.subr.mxu0 0.0
        %623 = vmatpush1.msra.mxu0 0.0
        %624 = vmatprep.subr.mxu0 0.0
        %625 = vmatpush1.msra.mxu0 0.0
        %626 = vmatprep.subr.mxu0 0.0
        %627 = vmatpush1.msra.mxu0 0.0
        %628 = vmatprep.subr.mxu0 0.0
        %629 = vmatpush1.msra.mxu0 0.0
        %630 = vmatprep.subr.mxu0 0.0
        %631 = vmatpush1.msra.mxu0 0.0
        %632 = vmatprep.subr.mxu0 0.0
        %633 = vmatpush1.msra.mxu0 0.0
        %634 = vmatprep.subr.mxu0 0.0
        %635 = vmatpush1.msra.mxu0 0.0
        %636 = vmatprep.subr.mxu0 0.0
        %637 = vmatpush1.msra.mxu0 0.0
        %638 = vmatprep.subr.mxu0 0.0
        %639 = vmatpush1.msra.mxu0 0.0
        %640 = vmatprep.subr.mxu0 0.0
        %641 = vmatpush1.msra.mxu0 0.0
        %642 = vmatprep.subr.mxu0 0.0
        %643 = vmatpush1.msra.mxu0 0.0
        %644 = vmatprep.subr.mxu0 0.0
        %645 = vmatpush1.msra.mxu0 0.0
        %646 = vmatprep.subr.mxu0 0.0
        %647 = vmatpush1.msra.mxu0 0.0
        %648 = vmatprep.subr.mxu0 0.0
        %649 = vmatpush1.msra.mxu0 0.0
        %650 = vmatprep.subr.mxu0 0.0
        %651 = vmatpush1.msra.mxu0 0.0
        %652 = vmatprep.subr.mxu0 0.0
        %653 = vmatpush1.msra.mxu0 0.0
        %654 = vmatprep.subr.mxu0 0.0
        %655 = vmatpush1.msra.mxu0 0.0
        %656 = vmatprep.subr.mxu0 0.0
        %657 = vmatpush1.msra.mxu0 0.0
        %658 = vmatprep.subr.mxu0 0.0
        %659 = vmatpush1.msra.mxu0 0.0
        %660 = vmatprep.subr.mxu0 0.0
        %661 = vmatpush1.msra.mxu0 0.0
        %662 = vmatprep.subr.mxu0 0.0
        %663 = vmatpush1.msra.mxu0 0.0
        %664 = vmatprep.subr.mxu0 0.0
        %665 = vmatpush1.msra.mxu0 0.0
        %666 = vmatprep.subr.mxu0 0.0
        %667 = vmatpush1.msra.mxu0 0.0
        %668 = vmatprep.subr.mxu0 0.0
        %669 = vmatpush1.msra.mxu0 0.0
        %670 = vmatprep.subr.mxu0 0.0
        %671 = vmatpush1.msra.mxu0 0.0
        %672 = vmatprep.subr.mxu0 0.0
        %673 = vmatpush1.msra.mxu0 0.0
        %674 = vmatprep.subr.mxu0 0.0
        %675 = vmatpush1.msra.mxu0 0.0
        %676 = vmatprep.subr.mxu0 0.0
        %677 = vmatpush1.msra.mxu0 0.0
        %678 = vmatprep.subr.mxu0 0.0
        %679 = vmatpush1.msra.mxu0 0.0
        %680 = vmatprep.subr.mxu0 0.0
        %681 = vmatpush1.msra.mxu0 0.0
        %682 = vmatprep.mubr.f32.mxu0 0.0
        %683 = vmatmul.mubr.f32.gmra.mrb[0].mxu0 %v616
        %v684 = vpop.f32.mrb[0].mxu0
        %v685 = vadd.f32 0.0, %v684
        %v686 = vpop.f32.mrb[0].mxu0
        %v687 = vadd.f32 0.0, %v686
        %688 = vdwg.mxu0
        %v689 = vadd.f32 %v415, %v685
        %v690 = vadd.f32 %v417, %v687
        %v691 = vld [vmem:[%s4] sm:$0xff]
        %693 = vset.pattern.permute.xlu0 0
        %694 = vperm.xlu0 %693, %v691
        %v695 = vpop.permute.xlu0 %694
        %v697 = vadd.f32 %v689, %v695
        %v698 = vadd.f32 %v690, %v695
        %v699 = vmax.f32 %v697, 0.0
        %v700 = vmax.f32 %v698, 0.0
        %701 = vst [vmem:[%s329] sm:$0xff] %v699
        %702 = vst [vmem:[%s329 + $0x8] sm:$0xff] %v700
        %s703 = sand.u32 %s205, 1
        %s704 = scalar_lea.sflag [#allocation4], %s703
        %s705 = sand.u32 %s205, 1
        %s706 = smul.addr %s705, 16
        %s707 = scalar_lea.vmem [#allocation7], %s706
        // Predicated region
        $region61: #{tpu_custom_call.1} parent=51 // pred_check
          %p708 = pneg %p215
        $region62: #{tpu_custom_call.1} parent=51 // pred_check_branch
          %710 = sbr.rel (%p708) target = $region64
        $region63: #{tpu_custom_call.1} parent=51 // pred_region
          %s711 = smul.u32 2, %s24
          %s713 = ssub.s32 256, 256
          %714 = vsyncadd %s704, %s713
          %s715 = smul.addr %s711, 128
          %s716 = scalar_lea.hbm %s8, %s715
          %s718 = sshll.u32 %s707, 4
          %s719 = int_to_ptr.vmem [resolvable:$true] %s718
          %721 = dma.vmem_to_hbm [thread:$0]  %s719, 256, %s716, %s704
        $region64: #{tpu_custom_call.1} parent=51 // pred_fallthru
          _
      $region52: #{tpu_custom_call.1} parent=5 // pred_fallthru
        _
      %p722 = scmp.le.s32.totalorder 2, %s19
      // Predicated region
      $region65: #{tpu_custom_call.1} parent=5 // pred_check
        %p723 = pneg %p722
      $region66: #{tpu_custom_call.1} parent=5 // pred_check_branch
        %725 = sbr.rel (%p723) target = $region68
      $region67: #{tpu_custom_call.1} parent=5 // pred_region
        %s726 = ssub.s32 %s19, 2
        // Predicated region
        $region69: #{tpu_custom_call.1} parent=67 // pred_check
          %p727 = pneg %p221
        $region70: #{tpu_custom_call.1} parent=67 // pred_check_branch
          %729 = sbr.rel (%p727) target = $region72
        $region71: #{tpu_custom_call.1} parent=67 // pred_region
          %s730 = sand.u32 %s206, 1
          %s731 = scalar_lea.sflag [#allocation4], %s730
          %s732 = sand.u32 %s206, 1
          %s733 = smul.addr %s732, 16
          %s734 = scalar_lea.vmem [#allocation7], %s733
          %735 = dma.done %s731, 256
        $region72: #{tpu_custom_call.1} parent=67 // pred_fallthru
          _
      $region68: #{tpu_custom_call.1} parent=5 // pred_fallthru
        _
    $region6: #{tpu_custom_call.1} parent=1 // loop_footer
      %s23 = sadd.s32 1, %s19
    $region7: #{tpu_custom_call.1} parent=1 // loop_footer_branch
      %18 = sbr.rel target = $region3
    $region8: #{tpu_custom_call.1} parent=1 // loop_exit
      _
    %736 = vsyncpa [#allocation3], 1
    %s737 = scalar_lea.sflag [#allocation3], 1
    %738 = vsyncpa %s737, 1
    %739 = vsyncpa [#allocation6], 1
    %740 = vsyncpa [#allocation4], 1
    %s741 = scalar_lea.sflag [#allocation4], 1
    %742 = vsyncpa %s741, 1

// kernel: tpu_custom_call.1
$region0: #{tpu_custom_call.1}
  #allocation0 [shape = 'u32[]', space=smem, size = 0x4, offset = 0x4, fixed_abs, tag = 'smem constant byte address 0x4 - core index']
  #allocation1 [shape = 'u32[144,128]{1,0:T(1,128)}', space=vmem, size = 0x12000, scoped, tag = 'internal scratch']
  %s0 = inlined_call_operand.vmem [shape: f32[8,512], index: 0, kind: input, shape index: {}]
  %s1 = inlined_call_operand.vmem [shape: f32[16,8], index: 1, kind: input, shape index: {}]
  %s2 = inlined_call_operand.vmem [shape: f32[8,8], index: 2, kind: input, shape index: {}]
  %s3 = inlined_call_operand.vmem [shape: f32[8,1], index: 3, kind: input, shape index: {}]
  %s4 = inlined_call_operand.vmem [shape: f32[8,1], index: 4, kind: input, shape index: {}]
  %s5 = inlined_call_operand.hbm [shape: f32[50,256], index: 5, kind: input, shape index: {}]
  %s6 = inlined_call_operand.hbm [shape: f32[50,256], index: 6, kind: input, shape index: {}]
  %s7 = inlined_call_operand.vmem [shape: f32[8,50], index: 7, kind: input, shape index: {}]
  %s8 = inlined_call_operand.hbm [shape: f32[8,512], index: 8, kind: output, shape index: {}]
  %s9 = sld [smem:[#allocation0]]
  $region73: #{tpu_custom_call.1} parent=0
    _
  %s11 = ssub.s32 1, %s9
  %s12 = scalar_select 0, %s11, %s9
  $region1: #{tpu_custom_call.1} parent=0
    #allocation2 [shape = 'u8[57344]{0}', space=vmem, size = 0xe000, scoped, tag = 'input window, operand 5, single buffered']
    #allocation3 [shape = 's32[2]{0}', space=sflag, size = 0x8, scoped, tag = 'scoped memory for tpu_custom_call.1']
    #allocation4 [shape = 's32[2]{0}', space=sflag, size = 0x8, scoped, tag = 'scoped memory for tpu_custom_call.1']
    #allocation5 [shape = 'u8[57344]{0}', space=vmem, size = 0xe000, scoped, tag = 'input window, operand 6, single buffered']
    #allocation6 [shape = 's32[1]{0}', space=sflag, size = 0x4, scoped, tag = 'scoped memory for tpu_custom_call.1']
    #allocation7 [shape = 'u8[16384]{0}', space=vmem, size = 0x4000, scoped, tag = 'output window, operand 0']
    %13 = vsyncpa [#allocation3], 0
    %14 = vsyncpa [#allocation6], 0
    %15 = vsyncpa [#allocation4], 0
    %s16 = scalar_lea.sflag [#allocation4], 1
    %17 = vsyncpa %s16, 0
    loop: start=0, step=1, limit=4
    $region2: #{tpu_custom_call.1} parent=1 // loop_pre_header
      _
    $region3: #{tpu_custom_call.1} parent=1 // loop_header
      %s19 = sphi 0, %s23
      %p20 = scmp.ge.s32.totalorder %s19, 4
      %s29 = sphi 0, %s31
      %s32 = sphi 0, %s29
      %s33 = sphi 0, %s32
      %s49 = sphi 0, %s33
      %s53 = sphi 0, %s53
      %s55 = sphi 0, %s53
      %s56 = sphi 0, %s55
      %s70 = sphi 0, %s56
      %s74 = sphi 0, %s74
      %s76 = sphi 0, %s74
      %s77 = sphi 0, %s76
      %s91 = sphi 0, %s77
      %s95 = sphi 0, %s95
      %s97 = sphi 0, %s95
      %s98 = sphi 0, %s97
      %s112 = sphi 0, %s98
      %s116 = sphi 0, %s116
      %s118 = sphi 0, %s116
      %s119 = sphi 0, %s118
      %s133 = sphi 0, %s119
      %s137 = sphi 0, %s137
      %s139 = sphi 0, %s137
      %s140 = sphi 0, %s139
      %s154 = sphi 0, %s140
      %s158 = sphi 0, %s158
      %s160 = sphi 0, %s158
      %s161 = sphi 0, %s160
      %s175 = sphi 0, %s161
      %s179 = sphi 0, %s179
      %s181 = sphi 0, %s179
      %s182 = sphi 0, %s181
      %s196 = sphi 0, %s182
      %s202 = sphi 0, %s204
      %s205 = sphi 0, %s202
      %s206 = sphi 0, %s205
      %s222 = sphi 0, %s206
    $region4: #{tpu_custom_call.1} parent=1 // loop_header_branch
      %22 = sbr.rel (%p20) target = $region8
    $region5: #{tpu_custom_call.1} parent=1 // loop_body
      %s24 = ssub.s32 %s19, 1
      %s25 = ssub.s32 %s19, 2
      %s26 = sadd.s32 %s19, 1
      %s27 = ssub.s32 %s19, %s26
      %p28 = scmp.eq.s32.totalorder %s27, 0
      %s30 = sadd.s32 %s29, 1
      %s31 = scalar_select %p28, %s29, %s30
      %p34 = pneg %p28
      %p35 = scmp.eq.s32.totalorder %s19, 1
      %p36 = por %p34, %p35
      %p37 = scmp.ne.s32.totalorder %s29, %s32
      %p38 = scmp.eq.s32.totalorder %s19, 0
      %p39 = por %p37, %p38
      %p40 = scmp.ne.s32.totalorder %s29, %s32
      %p41 = scmp.eq.s32.totalorder %s24, 1
      %p42 = por %p40, %p41
      %p43 = scmp.ne.s32.totalorder %s32, %s33
      %p44 = scmp.eq.s32.totalorder %s24, 0
      %p45 = por %p43, %p44
      %p46 = scmp.ne.s32.totalorder %s32, %s33
      %p47 = scmp.eq.s32.totalorder %s25, 1
      %p48 = por %p46, %p47
      %p50 = scmp.ne.s32.totalorder %s33, %s49
      %p51 = scmp.eq.s32.totalorder %s25, 0
      %p52 = por %p50, %p51
      %s54 = sadd.s32 %s53, 1
      %p57 = scmp.eq.s32.totalorder %s19, 1
      %p58 = scmp.ne.s32.totalorder %s53, %s55
      %p59 = scmp.eq.s32.totalorder %s19, 0
      %p60 = por %p58, %p59
      %p61 = scmp.ne.s32.totalorder %s53, %s55
      %p62 = scmp.eq.s32.totalorder %s24, 1
      %p63 = por %p61, %p62
      %p64 = scmp.ne.s32.totalorder %s55, %s56
      %p65 = scmp.eq.s32.totalorder %s24, 0
      %p66 = por %p64, %p65
      %p67 = scmp.ne.s32.totalorder %s55, %s56
      %p68 = scmp.eq.s32.totalorder %s25, 1
      %p69 = por %p67, %p68
      %p71 = scmp.ne.s32.totalorder %s56, %s70
      %p72 = scmp.eq.s32.totalorder %s25, 0
      %p73 = por %p71, %p72
      %s75 = sadd.s32 %s74, 1
      %p78 = scmp.eq.s32.totalorder %s19, 1
      %p79 = scmp.ne.s32.totalorder %s74, %s76
      %p80 = scmp.eq.s32.totalorder %s19, 0
      %p81 = por %p79, %p80
      %p82 = scmp.ne.s32.totalorder %s74, %s76
      %p83 = scmp.eq.s32.totalorder %s24, 1
      %p84 = por %p82, %p83
      %p85 = scmp.ne.s32.totalorder %s76, %s77
      %p86 = scmp.eq.s32.totalorder %s24, 0
      %p87 = por %p85, %p86
      %p88 = scmp.ne.s32.totalorder %s76, %s77
      %p89 = scmp.eq.s32.totalorder %s25, 1
      %p90 = por %p88, %p89
      %p92 = scmp.ne.s32.totalorder %s77, %s91
      %p93 = scmp.eq.s32.totalorder %s25, 0
      %p94 = por %p92, %p93
      %s96 = sadd.s32 %s95, 1
      %p99 = scmp.eq.s32.totalorder %s19, 1
      %p100 = scmp.ne.s32.totalorder %s95, %s97
      %p101 = scmp.eq.s32.totalorder %s19, 0
      %p102 = por %p100, %p101
      %p103 = scmp.ne.s32.totalorder %s95, %s97
      %p104 = scmp.eq.s32.totalorder %s24, 1
      %p105 = por %p103, %p104
      %p106 = scmp.ne.s32.totalorder %s97, %s98
      %p107 = scmp.eq.s32.totalorder %s24, 0
      %p108 = por %p106, %p107
      %p109 = scmp.ne.s32.totalorder %s97, %s98
      %p110 = scmp.eq.s32.totalorder %s25, 1
      %p111 = por %p109, %p110
      %p113 = scmp.ne.s32.totalorder %s98, %s112
      %p114 = scmp.eq.s32.totalorder %s25, 0
      %p115 = por %p113, %p114
      %s117 = sadd.s32 %s116, 1
      %p120 = scmp.eq.s32.totalorder %s19, 1
      %p121 = scmp.ne.s32.totalorder %s116, %s118
      %p122 = scmp.eq.s32.totalorder %s19, 0
      %p123 = por %p121, %p122
      %p124 = scmp.ne.s32.totalorder %s116, %s118
      %p125 = scmp.eq.s32.totalorder %s24, 1
      %p126 = por %p124, %p125
      %p127 = scmp.ne.s32.totalorder %s118, %s119
      %p128 = scmp.eq.s32.totalorder %s24, 0
      %p129 = por %p127, %p128
      %p130 = scmp.ne.s32.totalorder %s118, %s119
      %p131 = scmp.eq.s32.totalorder %s25, 1
      %p132 = por %p130, %p131
      %p134 = scmp.ne.s32.totalorder %s119, %s133
      %p135 = scmp.eq.s32.totalorder %s25, 0
      %p136 = por %p134, %p135
      %s138 = sadd.s32 %s137, 1
      %p141 = scmp.eq.s32.totalorder %s19, 1
      %p142 = scmp.ne.s32.totalorder %s137, %s139
      %p143 = scmp.eq.s32.totalorder %s19, 0
      %p144 = por %p142, %p143
      %p145 = scmp.ne.s32.totalorder %s137, %s139
      %p146 = scmp.eq.s32.totalorder %s24, 1
      %p147 = por %p145, %p146
      %p148 = scmp.ne.s32.totalorder %s139, %s140
      %p149 = scmp.eq.s32.totalorder %s24, 0
      %p150 = por %p148, %p149
      %p151 = scmp.ne.s32.totalorder %s139, %s140
      %p152 = scmp.eq.s32.totalorder %s25, 1
      %p153 = por %p151, %p152
      %p155 = scmp.ne.s32.totalorder %s140, %s154
      %p156 = scmp.eq.s32.totalorder %s25, 0
      %p157 = por %p155, %p156
      %s159 = sadd.s32 %s158, 1
      %p162 = scmp.eq.s32.totalorder %s19, 1
      %p163 = scmp.ne.s32.totalorder %s158, %s160
      %p164 = scmp.eq.s32.totalorder %s19, 0
      %p165 = por %p163, %p164
      %p166 = scmp.ne.s32.totalorder %s158, %s160
      %p167 = scmp.eq.s32.totalorder %s24, 1
      %p168 = por %p166, %p167
      %p169 = scmp.ne.s32.totalorder %s160, %s161
      %p170 = scmp.eq.s32.totalorder %s24, 0
      %p171 = por %p169, %p170
      %p172 = scmp.ne.s32.totalorder %s160, %s161
      %p173 = scmp.eq.s32.totalorder %s25, 1
      %p174 = por %p172, %p173
      %p176 = scmp.ne.s32.totalorder %s161, %s175
      %p177 = scmp.eq.s32.totalorder %s25, 0
      %p178 = por %p176, %p177
      %s180 = sadd.s32 %s179, 1
      %p183 = scmp.eq.s32.totalorder %s19, 1
      %p184 = scmp.ne.s32.totalorder %s179, %s181
      %p185 = scmp.eq.s32.totalorder %s19, 0
      %p186 = por %p184, %p185
      %p187 = scmp.ne.s32.totalorder %s179, %s181
      %p188 = scmp.eq.s32.totalorder %s24, 1
      %p189 = por %p187, %p188
      %p190 = scmp.ne.s32.totalorder %s181, %s182
      %p191 = scmp.eq.s32.totalorder %s24, 0
      %p192 = por %p190, %p191
      %p193 = scmp.ne.s32.totalorder %s181, %s182
      %p194 = scmp.eq.s32.totalorder %s25, 1
      %p195 = por %p193, %p194
      %p197 = scmp.ne.s32.totalorder %s182, %s196
      %p198 = scmp.eq.s32.totalorder %s25, 0
      %p199 = por %p197, %p198
      %s200 = ssub.s32 %s19, %s26
      %p201 = scmp.eq.s32.totalorder %s200, 0
      %s203 = sadd.s32 %s202, 1
      %s204 = scalar_select %p201, %s202, %s203
      %p207 = pneg %p201
      %p208 = scmp.eq.s32.totalorder %s19, 1
      %p209 = por %p207, %p208
      %p210 = scmp.ne.s32.totalorder %s202, %s205
      %p211 = scmp.eq.s32.totalorder %s19, 0
      %p212 = por %p210, %p211
      %p213 = scmp.ne.s32.totalorder %s202, %s205
      %p214 = scmp.eq.s32.totalorder %s24, 1
      %p215 = por %p213, %p214
      %p216 = scmp.ne.s32.totalorder %s205, %s206
      %p217 = scmp.eq.s32.totalorder %s24, 0
      %p218 = por %p216, %p217
      %p219 = scmp.ne.s32.totalorder %s205, %s206
      %p220 = scmp.eq.s32.totalorder %s25, 1
      %p221 = por %p219, %p220
      %p223 = scmp.ne.s32.totalorder %s206, %s222
      %p224 = scmp.eq.s32.totalorder %s25, 0
      %p225 = por %p223, %p224
      %p226 = scmp.le.s32.totalorder 1, %s19
      %p227 = scmp.lt.s32.totalorder %s19, 3
      %p228 = pnand %p226, %p227
      %p229 = pneg %p228
      // Predicated region
      $region9: #{tpu_custom_call.1} parent=5 // pred_check
        _
      $region10: #{tpu_custom_call.1} parent=5 // pred_check_branch
        %231 = sbr.rel (%p228) target = $region12
      $region11: #{tpu_custom_call.1} parent=5 // pred_region
        %s232 = ssub.s32 %s19, 1
        // Predicated region
        $region13: #{tpu_custom_call.1} parent=11 // pred_check
          %p233 = pneg %p66
        $region14: #{tpu_custom_call.1} parent=11 // pred_check_branch
          %235 = sbr.rel (%p233) target = $region16
        $region15: #{tpu_custom_call.1} parent=11 // pred_region
          _
        $region16: #{tpu_custom_call.1} parent=11 // pred_fallthru
          _
        // Predicated region
        $region17: #{tpu_custom_call.1} parent=11 // pred_check
          %p236 = pneg %p87
        $region18: #{tpu_custom_call.1} parent=11 // pred_check_branch
          %238 = sbr.rel (%p236) target = $region20
        $region19: #{tpu_custom_call.1} parent=11 // pred_region
          _
        $region20: #{tpu_custom_call.1} parent=11 // pred_fallthru
          _
        // Predicated region
        $region21: #{tpu_custom_call.1} parent=11 // pred_check
          %p239 = pneg %p108
        $region22: #{tpu_custom_call.1} parent=11 // pred_check_branch
          %241 = sbr.rel (%p239) target = $region24
        $region23: #{tpu_custom_call.1} parent=11 // pred_region
          _
        $region24: #{tpu_custom_call.1} parent=11 // pred_fallthru
          _
        // Predicated region
        $region25: #{tpu_custom_call.1} parent=11 // pred_check
          %p242 = pneg %p129
        $region26: #{tpu_custom_call.1} parent=11 // pred_check_branch
          %244 = sbr.rel (%p242) target = $region28
        $region27: #{tpu_custom_call.1} parent=11 // pred_region
          _
        $region28: #{tpu_custom_call.1} parent=11 // pred_fallthru
          _
        // Predicated region
        $region29: #{tpu_custom_call.1} parent=11 // pred_check
          %p245 = pneg %p150
        $region30: #{tpu_custom_call.1} parent=11 // pred_check_branch
          %247 = sbr.rel (%p245) target = $region32
        $region31: #{tpu_custom_call.1} parent=11 // pred_region
          %s249 = ssub.s32 1792, 1792
          %250 = vsyncadd [#allocation3], %s249
          %s251 = sshll.u32 [#allocation2], 4
          %s252 = int_to_ptr.vmem [resolvable:$true] %s251
          %257 = dma.hbm_to_vmem [thread:$0]  %s5, 1792, %s252, [#allocation3], 256, 256, 16
        $region32: #{tpu_custom_call.1} parent=11 // pred_fallthru
          _
        // Predicated region
        $region33: #{tpu_custom_call.1} parent=11 // pred_check
          %p258 = pneg %p171
        $region34: #{tpu_custom_call.1} parent=11 // pred_check_branch
          %260 = sbr.rel (%p258) target = $region36
        $region35: #{tpu_custom_call.1} parent=11 // pred_region
          %s262 = ssub.s32 1792, 1792
          %263 = vsyncadd [#allocation6], %s262
          %s264 = sshll.u32 [#allocation5], 4
          %s265 = int_to_ptr.vmem [resolvable:$true] %s264
          %270 = dma.hbm_to_vmem [thread:$0]  %s6, 1792, %s265, [#allocation6], 256, 256, 16
        $region36: #{tpu_custom_call.1} parent=11 // pred_fallthru
          _
        // Predicated region
        $region37: #{tpu_custom_call.1} parent=11 // pred_check
          %p271 = pneg %p192
        $region38: #{tpu_custom_call.1} parent=11 // pred_check_branch
          %273 = sbr.rel (%p271) target = $region40
        $region39: #{tpu_custom_call.1} parent=11 // pred_region
          _
        $region40: #{tpu_custom_call.1} parent=11 // pred_fallthru
          _
      $region12: #{tpu_custom_call.1} parent=5 // pred_fallthru
        _
      %p274 = scmp.lt.s32.totalorder %s19, 2
      // Predicated region
      $region41: #{tpu_custom_call.1} parent=5 // pred_check
        %p275 = pneg %p274
      $region42: #{tpu_custom_call.1} parent=5 // pred_check_branch
        %277 = sbr.rel (%p275) target = $region44
      $region43: #{tpu_custom_call.1} parent=5 // pred_region
        // Predicated region
        $region45: #{tpu_custom_call.1} parent=43 // pred_check
          %p278 = pneg %p39
        $region46: #{tpu_custom_call.1} parent=43 // pred_check_branch
          %280 = sbr.rel (%p278) target = $region48
        $region47: #{tpu_custom_call.1} parent=43 // pred_region
          %s281 = smul.u32 2, %s19
          %p282 = scmp.lt.s32.totalorder %s281, 3
          %s283 = scalar_select %p282, %s281, 3
          %s284 = smul.addr %s283, 8
          %s285 = scalar_lea.vmem %s0, %s284
          %s286 = smul.u32 2, %s19
        $region48: #{tpu_custom_call.1} parent=43 // pred_fallthru
          _
      $region44: #{tpu_custom_call.1} parent=5 // pred_fallthru
        _
      %p287 = scmp.le.s32.totalorder 1, %s19
      %p288 = scmp.lt.s32.totalorder %s19, 3
      %p289 = pnand %p287, %p288
      %p290 = pneg %p289
      // Predicated region
      $region49: #{tpu_custom_call.1} parent=5 // pred_check
        _
      $region50: #{tpu_custom_call.1} parent=5 // pred_check_branch
        %292 = sbr.rel (%p289) target = $region52
      $region51: #{tpu_custom_call.1} parent=5 // pred_region
        %s293 = ssub.s32 %s19, 1
        // Predicated region
        $region53: #{tpu_custom_call.1} parent=51 // pred_check
          %p294 = pneg %p150
        $region54: #{tpu_custom_call.1} parent=51 // pred_check_branch
          %296 = sbr.rel (%p294) target = $region56
        $region55: #{tpu_custom_call.1} parent=51 // pred_region
          %297 = dma.done [#allocation3], 1792
        $region56: #{tpu_custom_call.1} parent=51 // pred_fallthru
          _
        // Predicated region
        $region57: #{tpu_custom_call.1} parent=51 // pred_check
          %p298 = pneg %p171
        $region58: #{tpu_custom_call.1} parent=51 // pred_check_branch
          %300 = sbr.rel (%p298) target = $region60
        $region59: #{tpu_custom_call.1} parent=51 // pred_region
          %301 = dma.done [#allocation6], 1792
        $region60: #{tpu_custom_call.1} parent=51 // pred_fallthru
          _
        %s302 = smul.u32 2, %s24
        %p303 = scmp.lt.s32.totalorder %s302, 3
        %s304 = scalar_select %p303, %s302, 3
        %s305 = smul.addr %s304, 8
        %s306 = scalar_lea.vmem %s0, %s305
        %p307 = pneg %p45
        %p308 = pneg %p42
        %p309 = pneg %p66
        %p310 = pneg %p63
        %p311 = pneg %p87
        %p312 = pneg %p84
        %p313 = pneg %p108
        %p314 = pneg %p105
        %p315 = pneg %p129
        %p316 = pneg %p126
        %p317 = pneg %p150
        %p318 = pneg %p147
        %p319 = pneg %p171
        %p320 = pneg %p168
        %p321 = pneg %p192
        %p322 = pneg %p189
        %p323 = pneg %p218
        %p324 = pneg %p215
        %s325 = sand.u32 %s205, 1
        %s326 = scalar_lea.sflag [#allocation4], %s325
        %s327 = sand.u32 %s205, 1
        %s328 = smul.addr %s327, 16
        %s329 = scalar_lea.vmem [#allocation7], %s328
        %s330 = smul.u32 2, %s24
        %p331 = scmp.lt.s32.totalorder %s330, 3
        %s332 = scalar_select %p331, %s330, 3
        %s333 = smul.addr %s332, 8
        %s334 = scalar_lea.vmem %s0, %s333
        %s335 = smul.u32 2, %s24
        %s336 = smul.u32 2, %s24
        %v337 = vld [vmem:[%s334] sm:$0xff]
        %v338 = vld [vmem:[%s334 + $0x8] sm:$0xff]
        %v339 = vld [vmem:[%s1] sm:$0xff]
        %v340 = vld [vmem:[%s1 + $0x8] sm:$0xff]
        %vm341 = vcmask 64512
        %v343 = vsel %vm341, %v339, 0
        %v346 = vsel %vm341, %v340, 0
        %348 = vmatprep.subr.mxu0 %v338
        %349 = vmatpush1.msra.mxu0 %v337
        %350 = vmatprep.subr.mxu0 0.0
        %351 = vmatpush1.msra.mxu0 0.0
        %352 = vmatprep.subr.mxu0 0.0
        %353 = vmatpush1.msra.mxu0 0.0
        %354 = vmatprep.subr.mxu0 0.0
        %355 = vmatpush1.msra.mxu0 0.0
        %356 = vmatprep.subr.mxu0 0.0
        %357 = vmatpush1.msra.mxu0 0.0
        %358 = vmatprep.subr.mxu0 0.0
        %359 = vmatpush1.msra.mxu0 0.0
        %360 = vmatprep.subr.mxu0 0.0
        %361 = vmatpush1.msra.mxu0 0.0
        %362 = vmatprep.subr.mxu0 0.0
        %363 = vmatpush1.msra.mxu0 0.0
        %364 = vmatprep.subr.mxu0 0.0
        %365 = vmatpush1.msra.mxu0 0.0
        %366 = vmatprep.subr.mxu0 0.0
        %367 = vmatpush1.msra.mxu0 0.0
        %368 = vmatprep.subr.mxu0 0.0
        %369 = vmatpush1.msra.mxu0 0.0
        %370 = vmatprep.subr.mxu0 0.0
        %371 = vmatpush1.msra.mxu0 0.0
        %372 = vmatprep.subr.mxu0 0.0
        %373 = vmatpush1.msra.mxu0 0.0
        %374 = vmatprep.subr.mxu0 0.0
        %375 = vmatpush1.msra.mxu0 0.0
        %376 = vmatprep.subr.mxu0 0.0
        %377 = vmatpush1.msra.mxu0 0.0
        %378 = vmatprep.subr.mxu0 0.0
        %379 = vmatpush1.msra.mxu0 0.0
        %380 = vmatprep.subr.mxu0 0.0
        %381 = vmatpush1.msra.mxu0 0.0
        %382 = vmatprep.subr.mxu0 0.0
        %383 = vmatpush1.msra.mxu0 0.0
        %384 = vmatprep.subr.mxu0 0.0
        %385 = vmatpush1.msra.mxu0 0.0
        %386 = vmatprep.subr.mxu0 0.0
        %387 = vmatpush1.msra.mxu0 0.0
        %388 = vmatprep.subr.mxu0 0.0
        %389 = vmatpush1.msra.mxu0 0.0
        %390 = vmatprep.subr.mxu0 0.0
        %391 = vmatpush1.msra.mxu0 0.0
        %392 = vmatprep.subr.mxu0 0.0
        %393 = vmatpush1.msra.mxu0 0.0
        %394 = vmatprep.subr.mxu0 0.0
        %395 = vmatpush1.msra.mxu0 0.0
        %396 = vmatprep.subr.mxu0 0.0
        %397 = vmatpush1.msra.mxu0 0.0
        %398 = vmatprep.subr.mxu0 0.0
        %399 = vmatpush1.msra.mxu0 0.0
        %400 = vmatprep.subr.mxu0 0.0
        %401 = vmatpush1.msra.mxu0 0.0
        %402 = vmatprep.subr.mxu0 0.0
        %403 = vmatpush1.msra.mxu0 0.0
        %404 = vmatprep.subr.mxu0 0.0
        %405 = vmatpush1.msra.mxu0 0.0
        %406 = vmatprep.subr.mxu0 0.0
        %407 = vmatpush1.msra.mxu0 0.0
        %408 = vmatprep.subr.mxu0 0.0
        %409 = vmatpush1.msra.mxu0 0.0
        %410 = vmatprep.subr.mxu0 0.0
        %411 = vmatpush1.msra.mxu0 0.0
        %412 = vmatprep.mubr.f32.mxu0 0.0
        %413 = vmatmul.mubr.f32.gmra.mrb[0].mxu0 %v343
        %v414 = vpop.f32.mrb[0].mxu0
        %v415 = vadd.f32 0.0, %v414
        %v416 = vpop.f32.mrb[0].mxu0
        %v417 = vadd.f32 0.0, %v416
        %418 = vmatprep.mubr.f32.mxu0 0.0
        %419 = vmatmul.mubr.f32.gmra.mrb[0].mxu0 %v346
        %v420 = vpop.f32.mrb[0].mxu0
        %v421 = vadd.f32 0.0, %v420
        %v422 = vpop.f32.mrb[0].mxu0
        %v423 = vadd.f32 0.0, %v422
        %424 = vdwg.mxu0
        %v425 = vld [vmem:[#allocation2] sm:$0xff]
        %v426 = vld [vmem:[#allocation2 + $0x8] sm:$0xff]
        %v427 = vld [vmem:[#allocation2 + $0x10] sm:$0xff]
        %v428 = vld [vmem:[#allocation2 + $0x18] sm:$0xff]
        %v429 = vld [vmem:[#allocation2 + $0x20] sm:$0xff]
        %v430 = vld [vmem:[#allocation2 + $0x28] sm:$0xff]
        %v431 = vld [vmem:[#allocation2 + $0x30] sm:$0xff]
        %v432 = vld [vmem:[#allocation2 + $0x38] sm:$0xff]
        %v433 = vld [vmem:[#allocation2 + $0x40] sm:$0xff]
        %v434 = vld [vmem:[#allocation2 + $0x48] sm:$0xff]
        %v435 = vld [vmem:[#allocation2 + $0x50] sm:$0xff]
        %v436 = vld [vmem:[#allocation2 + $0x58] sm:$0xff]
        %v437 = vld [vmem:[#allocation2 + $0x60] sm:$0x3]
        %v438 = vld [vmem:[#allocation2 + $0x68] sm:$0x3]
        %v439 = vld [vmem:[%s3] sm:$0xff]
        %441 = vset.pattern.permute.xlu0 0
        %442 = vperm.xlu0 %441, %v439
        %v443 = vpop.permute.xlu0 %442
        %445 = vmatprep.subr.mxu0 %v426
        %446 = vmatpush1.xpose.msra.mxu0 %v425
        %447 = vmatprep.subr.mxu0 %v428
        %448 = vmatpush1.xpose.msra.mxu0 %v427
        %449 = vmatprep.subr.mxu0 %v430
        %450 = vmatpush1.xpose.msra.mxu0 %v429
        %451 = vmatprep.subr.mxu0 %v432
        %452 = vmatpush1.xpose.msra.mxu0 %v431
        %453 = vmatprep.subr.mxu0 %v434
        %454 = vmatpush1.xpose.msra.mxu0 %v433
        %455 = vmatprep.subr.mxu0 %v436
        %456 = vmatpush1.xpose.msra.mxu0 %v435
        %457 = vmatprep.subr.mxu0 %v438
        %458 = vmatpush1.xpose.msra.mxu0 %v437
        %459 = vmatprep.subr.mxu0 0.0
        %460 = vmatpush1.xpose.msra.mxu0 0.0
        %461 = vmatprep.subr.mxu0 0.0
        %462 = vmatpush1.xpose.msra.mxu0 0.0
        %463 = vmatprep.subr.mxu0 0.0
        %464 = vmatpush1.xpose.msra.mxu0 0.0
        %465 = vmatprep.subr.mxu0 0.0
        %466 = vmatpush1.xpose.msra.mxu0 0.0
        %467 = vmatprep.subr.mxu0 0.0
        %468 = vmatpush1.xpose.msra.mxu0 0.0
        %469 = vmatprep.subr.mxu0 0.0
        %470 = vmatpush1.xpose.msra.mxu0 0.0
        %471 = vmatprep.subr.mxu0 0.0
        %472 = vmatpush1.xpose.msra.mxu0 0.0
        %473 = vmatprep.subr.mxu0 0.0
        %474 = vmatpush1.xpose.msra.mxu0 0.0
        %475 = vmatprep.subr.mxu0 0.0
        %476 = vmatpush1.xpose.msra.mxu0 0.0
        %477 = vmatprep.subr.mxu0 0.0
        %478 = vmatpush1.xpose.msra.mxu0 0.0
        %479 = vmatprep.subr.mxu0 0.0
        %480 = vmatpush1.xpose.msra.mxu0 0.0
        %481 = vmatprep.subr.mxu0 0.0
        %482 = vmatpush1.xpose.msra.mxu0 0.0
        %483 = vmatprep.subr.mxu0 0.0
        %484 = vmatpush1.xpose.msra.mxu0 0.0
        %485 = vmatprep.subr.mxu0 0.0
        %486 = vmatpush1.xpose.msra.mxu0 0.0
        %487 = vmatprep.subr.mxu0 0.0
        %488 = vmatpush1.xpose.msra.mxu0 0.0
        %489 = vmatprep.subr.mxu0 0.0
        %490 = vmatpush1.xpose.msra.mxu0 0.0
        %491 = vmatprep.subr.mxu0 0.0
        %492 = vmatpush1.xpose.msra.mxu0 0.0
        %493 = vmatprep.subr.mxu0 0.0
        %494 = vmatpush1.xpose.msra.mxu0 0.0
        %495 = vmatprep.subr.mxu0 0.0
        %496 = vmatpush1.xpose.msra.mxu0 0.0
        %497 = vmatprep.subr.mxu0 0.0
        %498 = vmatpush1.xpose.msra.mxu0 0.0
        %499 = vmatprep.subr.mxu0 0.0
        %500 = vmatpush1.xpose.msra.mxu0 0.0
        %501 = vmatprep.subr.mxu0 0.0
        %502 = vmatpush1.xpose.msra.mxu0 0.0
        %503 = vmatprep.subr.mxu0 0.0
        %504 = vmatpush1.xpose.msra.mxu0 0.0
        %505 = vmatprep.subr.mxu0 0.0
        %506 = vmatpush1.xpose.msra.mxu0 0.0
        %507 = vmatprep.subr.mxu0 0.0
        %508 = vmatpush1.xpose.msra.mxu0 0.0
        %509 = vmatprep.mubr.f32.mxu0 %v423
        %510 = vmatmul.mubr.f32.gmra.mrb[0].mxu0 %v421
        %v511 = vpop.f32.mrb[0].mxu0
        %v512 = vadd.f32 %v443, %v511
        %v513 = vpop.f32.mrb[0].mxu0
        %514 = vdwg.mxu0
        %v515 = vmax.f32 %v512, 0.0
        %v516 = vld [vmem:[%s7] sm:$0xff]
        %v517 = vmul.f32 %v515, %v516
        %v518 = vld [vmem:[#allocation5] sm:$0xff]
        %v519 = vld [vmem:[#allocation5 + $0x8] sm:$0xff]
        %v520 = vld [vmem:[#allocation5 + $0x10] sm:$0xff]
        %v521 = vld [vmem:[#allocation5 + $0x18] sm:$0xff]
        %v522 = vld [vmem:[#allocation5 + $0x20] sm:$0xff]
        %v523 = vld [vmem:[#allocation5 + $0x28] sm:$0xff]
        %v524 = vld [vmem:[#allocation5 + $0x30] sm:$0xff]
        %v525 = vld [vmem:[#allocation5 + $0x38] sm:$0xff]
        %v526 = vld [vmem:[#allocation5 + $0x40] sm:$0xff]
        %v527 = vld [vmem:[#allocation5 + $0x48] sm:$0xff]
        %v528 = vld [vmem:[#allocation5 + $0x50] sm:$0xff]
        %v529 = vld [vmem:[#allocation5 + $0x58] sm:$0xff]
        %v530 = vld [vmem:[#allocation5 + $0x60] sm:$0x3]
        %v531 = vld [vmem:[#allocation5 + $0x68] sm:$0x3]
        %vm532 = vcmask 408576
        %v534 = vsel %vm532, %v517, 0
        %vm536 = vcmask 1041408
        %v538 = vsel %vm536, %v530, 0
        %v541 = vsel %vm536, %v531, 0
        %543 = vmatprep.subr.mxu0 %v519
        %544 = vmatpush1.msra.mxu0 %v518
        %545 = vmatprep.subr.mxu0 %v521
        %546 = vmatpush1.msra.mxu0 %v520
        %547 = vmatprep.subr.mxu0 %v523
        %548 = vmatpush1.msra.mxu0 %v522
        %549 = vmatprep.subr.mxu0 %v525
        %550 = vmatpush1.msra.mxu0 %v524
        %551 = vmatprep.subr.mxu0 %v527
        %552 = vmatpush1.msra.mxu0 %v526
        %553 = vmatprep.subr.mxu0 %v529
        %554 = vmatpush1.msra.mxu0 %v528
        %555 = vmatprep.subr.mxu0 %v541
        %556 = vmatpush1.msra.mxu0 %v538
        %557 = vmatprep.subr.mxu0 0.0
        %558 = vmatpush1.msra.mxu0 0.0
        %559 = vmatprep.subr.mxu0 0.0
        %560 = vmatpush1.msra.mxu0 0.0
        %561 = vmatprep.subr.mxu0 0.0
        %562 = vmatpush1.msra.mxu0 0.0
        %563 = vmatprep.subr.mxu0 0.0
        %564 = vmatpush1.msra.mxu0 0.0
        %565 = vmatprep.subr.mxu0 0.0
        %566 = vmatpush1.msra.mxu0 0.0
        %567 = vmatprep.subr.mxu0 0.0
        %568 = vmatpush1.msra.mxu0 0.0
        %569 = vmatprep.subr.mxu0 0.0
        %570 = vmatpush1.msra.mxu0 0.0
        %571 = vmatprep.subr.mxu0 0.0
        %572 = vmatpush1.msra.mxu0 0.0
        %573 = vmatprep.subr.mxu0 0.0
        %574 = vmatpush1.msra.mxu0 0.0
        %575 = vmatprep.subr.mxu0 0.0
        %576 = vmatpush1.msra.mxu0 0.0
        %577 = vmatprep.subr.mxu0 0.0
        %578 = vmatpush1.msra.mxu0 0.0
        %579 = vmatprep.subr.mxu0 0.0
        %580 = vmatpush1.msra.mxu0 0.0
        %581 = vmatprep.subr.mxu0 0.0
        %582 = vmatpush1.msra.mxu0 0.0
        %583 = vmatprep.subr.mxu0 0.0
        %584 = vmatpush1.msra.mxu0 0.0
        %585 = vmatprep.subr.mxu0 0.0
        %586 = vmatpush1.msra.mxu0 0.0
        %587 = vmatprep.subr.mxu0 0.0
        %588 = vmatpush1.msra.mxu0 0.0
        %589 = vmatprep.subr.mxu0 0.0
        %590 = vmatpush1.msra.mxu0 0.0
        %591 = vmatprep.subr.mxu0 0.0
        %592 = vmatpush1.msra.mxu0 0.0
        %593 = vmatprep.subr.mxu0 0.0
        %594 = vmatpush1.msra.mxu0 0.0
        %595 = vmatprep.subr.mxu0 0.0
        %596 = vmatpush1.msra.mxu0 0.0
        %597 = vmatprep.subr.mxu0 0.0
        %598 = vmatpush1.msra.mxu0 0.0
        %599 = vmatprep.subr.mxu0 0.0
        %600 = vmatpush1.msra.mxu0 0.0
        %601 = vmatprep.subr.mxu0 0.0
        %602 = vmatpush1.msra.mxu0 0.0
        %603 = vmatprep.subr.mxu0 0.0
        %604 = vmatpush1.msra.mxu0 0.0
        %605 = vmatprep.subr.mxu0 0.0
        %606 = vmatpush1.msra.mxu0 0.0
        %607 = vmatprep.mubr.f32.mxu0 0.0
        %608 = vmatmul.mubr.f32.gmra.mrb[0].mxu0 %v534
        %v609 = vpop.f32.mrb[0].mxu0
        %v610 = vadd.f32 0.0, %v609
        %v611 = vpop.f32.mrb[0].mxu0
        %v612 = vadd.f32 0.0, %v611
        %613 = vdwg.mxu0
        %v614 = vld [vmem:[%s2] sm:$0xff]
        %v616 = vsel %vm341, %v614, 0
        %618 = vmatprep.subr.mxu0 %v612
        %619 = vmatpush1.msra.mxu0 %v610
        %620 = vmatprep.subr.mxu0 0.0
        %621 = vmatpush1.msra.mxu0 0.0
        %622 = vmatprep.subr.mxu0 0.0
        %623 = vmatpush1.msra.mxu0 0.0
        %624 = vmatprep.subr.mxu0 0.0
        %625 = vmatpush1.msra.mxu0 0.0
        %626 = vmatprep.subr.mxu0 0.0
        %627 = vmatpush1.msra.mxu0 0.0
        %628 = vmatprep.subr.mxu0 0.0
        %629 = vmatpush1.msra.mxu0 0.0
        %630 = vmatprep.subr.mxu0 0.0
        %631 = vmatpush1.msra.mxu0 0.0
        %632 = vmatprep.subr.mxu0 0.0
        %633 = vmatpush1.msra.mxu0 0.0
        %634 = vmatprep.subr.mxu0 0.0
        %635 = vmatpush1.msra.mxu0 0.0
        %636 = vmatprep.subr.mxu0 0.0
        %637 = vmatpush1.msra.mxu0 0.0
        %638 = vmatprep.subr.mxu0 0.0
        %639 = vmatpush1.msra.mxu0 0.0
        %640 = vmatprep.subr.mxu0 0.0
        %641 = vmatpush1.msra.mxu0 0.0
        %642 = vmatprep.subr.mxu0 0.0
        %643 = vmatpush1.msra.mxu0 0.0
        %644 = vmatprep.subr.mxu0 0.0
        %645 = vmatpush1.msra.mxu0 0.0
        %646 = vmatprep.subr.mxu0 0.0
        %647 = vmatpush1.msra.mxu0 0.0
        %648 = vmatprep.subr.mxu0 0.0
        %649 = vmatpush1.msra.mxu0 0.0
        %650 = vmatprep.subr.mxu0 0.0
        %651 = vmatpush1.msra.mxu0 0.0
        %652 = vmatprep.subr.mxu0 0.0
        %653 = vmatpush1.msra.mxu0 0.0
        %654 = vmatprep.subr.mxu0 0.0
        %655 = vmatpush1.msra.mxu0 0.0
        %656 = vmatprep.subr.mxu0 0.0
        %657 = vmatpush1.msra.mxu0 0.0
        %658 = vmatprep.subr.mxu0 0.0
        %659 = vmatpush1.msra.mxu0 0.0
        %660 = vmatprep.subr.mxu0 0.0
        %661 = vmatpush1.msra.mxu0 0.0
        %662 = vmatprep.subr.mxu0 0.0
        %663 = vmatpush1.msra.mxu0 0.0
        %664 = vmatprep.subr.mxu0 0.0
        %665 = vmatpush1.msra.mxu0 0.0
        %666 = vmatprep.subr.mxu0 0.0
        %667 = vmatpush1.msra.mxu0 0.0
        %668 = vmatprep.subr.mxu0 0.0
        %669 = vmatpush1.msra.mxu0 0.0
        %670 = vmatprep.subr.mxu0 0.0
        %671 = vmatpush1.msra.mxu0 0.0
        %672 = vmatprep.subr.mxu0 0.0
        %673 = vmatpush1.msra.mxu0 0.0
        %674 = vmatprep.subr.mxu0 0.0
        %675 = vmatpush1.msra.mxu0 0.0
        %676 = vmatprep.subr.mxu0 0.0
        %677 = vmatpush1.msra.mxu0 0.0
        %678 = vmatprep.subr.mxu0 0.0
        %679 = vmatpush1.msra.mxu0 0.0
        %680 = vmatprep.subr.mxu0 0.0
        %681 = vmatpush1.msra.mxu0 0.0
        %682 = vmatprep.mubr.f32.mxu0 0.0
        %683 = vmatmul.mubr.f32.gmra.mrb[0].mxu0 %v616
        %v684 = vpop.f32.mrb[0].mxu0
        %v685 = vadd.f32 0.0, %v684
        %v686 = vpop.f32.mrb[0].mxu0
        %v687 = vadd.f32 0.0, %v686
        %688 = vdwg.mxu0
        %v689 = vadd.f32 %v415, %v685
        %v690 = vadd.f32 %v417, %v687
        %v691 = vld [vmem:[%s4] sm:$0xff]
        %693 = vset.pattern.permute.xlu0 0
        %694 = vperm.xlu0 %693, %v691
        %v695 = vpop.permute.xlu0 %694
        %v697 = vadd.f32 %v689, %v695
        %v698 = vadd.f32 %v690, %v695
        %v699 = vmax.f32 %v697, 0.0
        %v700 = vmax.f32 %v698, 0.0
        %701 = vst [vmem:[%s329] sm:$0xff] %v699
        %702 = vst [vmem:[%s329 + $0x8] sm:$0xff] %v700
        %s703 = sand.u32 %s205, 1
        %s704 = scalar_lea.sflag [#allocation4], %s703
        %s705 = sand.u32 %s205, 1
        %s706 = smul.addr %s705, 16
        %s707 = scalar_lea.vmem [#allocation7], %s706
        // Predicated region
        $region61: #{tpu_custom_call.1} parent=51 // pred_check
          %p708 = pneg %p215
        $region62: #{tpu_custom_call.1} parent=51 // pred_check_branch
          %710 = sbr.rel (%p708) target = $region64
        $region63: #{tpu_custom_call.1} parent=51 // pred_region
          %s711 = smul.u32 2, %s24
          %s713 = ssub.s32 256, 256
          %714 = vsyncadd %s704, %s713
          %s715 = smul.addr %s711, 128
          %s716 = scalar_lea.hbm %s8, %s715
          %s718 = sshll.u32 %s707, 4
          %s719 = int_to_ptr.vmem [resolvable:$true] %s718
          %721 = dma.vmem_to_hbm [thread:$0]  %s719, 256, %s716, %s704
        $region64: #{tpu_custom_call.1} parent=51 // pred_fallthru
          _
      $region52: #{tpu_custom_call.1} parent=5 // pred_fallthru
        _
      %p722 = scmp.le.s32.totalorder 2, %s19
      // Predicated region
      $region65: #{tpu_custom_call.1} parent=5 // pred_check
        %p723 = pneg %p722
      $region66: #{tpu_custom_call.1} parent=5 // pred_check_branch
        %725 = sbr.rel (%p723) target = $region68
      $region67: #{tpu_custom_call.1} parent=5 // pred_region
        %s726 = ssub.s32 %s19, 2
        // Predicated region
        $region69: #{tpu_custom_call.1} parent=67 // pred_check
          %p727 = pneg %p221
        $region70: #{tpu_custom_call.1} parent=67 // pred_check_branch
          %729 = sbr.rel (%p727) target = $region72
        $region71: #{tpu_custom_call.1} parent=67 // pred_region
          %s730 = sand.u32 %s206, 1
          %s731 = scalar_lea.sflag [#allocation4], %s730
          %s732 = sand.u32 %s206, 1
          %s733 = smul.addr %s732, 16
          %s734 = scalar_lea.vmem [#allocation7], %s733
          %735 = dma.done %s731, 256
        $region72: #{tpu_custom_call.1} parent=67 // pred_fallthru
          _
      $region68: #{tpu_custom_call.1} parent=5 // pred_fallthru
        _
    $region6: #{tpu_custom_call.1} parent=1 // loop_footer
      %s23 = sadd.s32 1, %s19
    $region7: #{tpu_custom_call.1} parent=1 // loop_footer_branch
      %18 = sbr.rel target = $region3
    $region8: #{tpu_custom_call.1} parent=1 // loop_exit
      _
    %736 = vsyncpa [#allocation3], 1
    %s737 = scalar_lea.sflag [#allocation3], 1
    %738 = vsyncpa %s737, 1
    %739 = vsyncpa [#allocation6], 1
    %740 = vsyncpa [#allocation4], 1
    %s741 = scalar_lea.sflag [#allocation4], 1
    %742 = vsyncpa %s741, 1

</llo_original>
